<compile_context>
chip_gen: v7x
topology: tpu7x:2x2x1
jax: 0.10.0
libtpu: 0.0.40
codegen_flags: <defaults>
</compile_context>

<pallas_src>
import functools

import jax
import jax.numpy as jnp
from jax.experimental import pallas as pl
from jax.experimental.pallas import tpu as pltpu

LN_EPS = 1e-5   # torch.nn.LayerNorm default


def ffn_kernel(x_ref, w1_ref, b1_ref, w2_ref, b2_ref, g_ref, beta_ref,
               o_ref, acc_ref):
    k = pl.program_id(1)

    @pl.when(k == 0)
    def _():
        acc_ref[...] = jnp.zeros_like(acc_ref)

    x = x_ref[...]                                   # (tm, D), native dtype
    xm = x.astype(w1_ref.dtype)                      # MXU feed in weight dtype
    # linear1 (this F-chunk) on the MXU, f32 accumulation.
    h = jnp.dot(xm, w1_ref[...], preferred_element_type=jnp.float32)
    # Fused bias + ReLU + downcast: one (tm, tf) intermediate stays live.
    h = jnp.maximum(h + b1_ref[...].astype(jnp.float32),
                    0.0).astype(w2_ref.dtype)
    # linear2 partial product for this F-chunk, accumulated in f32.
    acc_ref[...] += jnp.dot(h, w2_ref[...], preferred_element_type=jnp.float32)

    @pl.when(k == pl.num_programs(1) - 1)
    def _():
        # bias2 + residual + LayerNorm epilogue, all in f32.
        t = x.astype(jnp.float32) + acc_ref[...] + b2_ref[...].astype(jnp.float32)
        inv_d = 1.0 / t.shape[-1]
        mean = jnp.sum(t, axis=-1, keepdims=True) * inv_d
        mean_sq = jnp.sum(t * t, axis=-1, keepdims=True) * inv_d
        var = mean_sq - mean * mean                  # one-pass variance
        normed = (t - mean) * jax.lax.rsqrt(var + LN_EPS)
        o_ref[...] = (normed * g_ref[...].astype(jnp.float32)
                      + beta_ref[...].astype(jnp.float32)).astype(o_ref.dtype)


def _round_up(x, m):
    return (x + m - 1) // m * m


@functools.lru_cache(maxsize=None)
def _single_buffer_supported():
    """One-time feature probe: does this build accept pl.Buffered(1) for a
    grid-invariant block?  Runs eagerly (even under an outer jit trace) so the
    real pallas_call never needs a broad try/except fallback."""
    def probe(a_ref, b_ref, o_ref):
        o_ref[...] = a_ref[...] + b_ref[...]
    try:
        with jax.ensure_compile_time_eval():
            a = jnp.zeros((8, 128), jnp.float32)
            out = pl.pallas_call(
                probe,
                out_shape=jax.ShapeDtypeStruct((8, 128), jnp.float32),
                grid=(2,),
                in_specs=[pl.BlockSpec((8, 128), lambda i: (0, 0)),
                          pl.BlockSpec((8, 128), lambda i: (0, 0),
                                       pipeline_mode=pl.Buffered(1))],
                out_specs=pl.BlockSpec((8, 128), lambda i: (0, 0)),
            )(a, a)
            jax.block_until_ready(out)
        return True
    except Exception:
        return False


def _pick_f_tile(D, F, w_bytes):
    """K-tile over F only when fully-resident W1+W2 would use > ~24 MiB."""
    if 2 * D * F * w_bytes <= 24 * 1024 * 1024:
        return F
    best = None
    for cand in (4096, 2048, 1024, 512, 256, 128):
        if cand < F and F % cand == 0:
            best = cand
            if 4 * D * cand * w_bytes <= 16 * 1024 * 1024:   # dbl-buffered blocks
                return cand
    return best if best is not None else F


def _pick_tile_rows(N, requested):
    t = max(8, min(_round_up(requested, 8), _round_up(N, 8)))
    # Prefer >= 4 row-grid steps (sharding across v7x's 2 TCs + pipeline
    # overlap) as long as the tile stays >= 128 rows tall.
    while t >= 256 and (N + t - 1) // t < 4:
        t = _round_up(t // 2, 8)
    return t


def _vmem_estimate(tm, D, F, tf, x_bytes, w_bytes, single_buf):
    n_f = (F + tf - 1) // tf
    stream_xo = 2 * 2 * tm * D * x_bytes                 # x + out, double-buffered
    w_block = 2 * D * tf * w_bytes + tf * 4              # W1 + W2 + b1 blocks
    w_bufs = w_block * (1 if (n_f == 1 and single_buf) else 2)
    small = 3 * D * 4 * (1 if single_buf else 2)         # b2, gamma, beta
    acc = tm * D * 4                                     # f32 accumulator scratch
    work = tm * tf * (4 + w_bytes) + 2 * tm * D * 4      # h (f32 + downcast), t
    return stream_xo + w_bufs + small + acc + work


def _build_call(N, D, F, tm, tf, out_dtype, single_buf, vmem_limit):
    n_f = pl.cdiv(F, tf)

    def const_spec(shape):
        # Grid-invariant block: fetched once; single-buffer it when supported.
        if single_buf:
            return pl.BlockSpec(shape, lambda i, k: (0, 0),
                                pipeline_mode=pl.Buffered(1))
        return pl.BlockSpec(shape, lambda i, k: (0, 0))

    if n_f == 1:
        w1_spec = const_spec((D, tf))
        b1_spec = const_spec((1, tf))
        w2_spec = const_spec((tf, D))
    else:
        w1_spec = pl.BlockSpec((D, tf), lambda i, k: (0, k))
        b1_spec = pl.BlockSpec((1, tf), lambda i, k: (0, k))
        w2_spec = pl.BlockSpec((tf, D), lambda i, k: (k, 0))

    # NOTE: on v5e, sweeping pl.Buffered(3) on the streamed x/out specs can
    # further hide DMA latency; default double-buffering is kept here.
    return pl.pallas_call(
        ffn_kernel,
        out_shape=jax.ShapeDtypeStruct((N, D), out_dtype),
        grid_spec=pltpu.PrefetchScalarGridSpec(
            num_scalar_prefetch=0,
            grid=(pl.cdiv(N, tm), n_f),
            in_specs=[
                pl.BlockSpec((tm, D), lambda i, k: (i, 0)),   # x rows (streamed)
                w1_spec,                                      # W1
                b1_spec,                                      # b1
                w2_spec,                                      # W2
                const_spec((1, D)),                           # b2
                const_spec((1, D)),                           # gamma
                const_spec((1, D)),                           # beta
            ],
            out_specs=pl.BlockSpec((tm, D), lambda i, k: (i, 0)),
            scratch_shapes=[pltpu.VMEM((tm, D), jnp.float32)],
        ),
        compiler_params=pltpu.CompilerParams(
            dimension_semantics=("parallel", "arbitrary"),
            vmem_limit_bytes=vmem_limit),
    )


def ffn_layer(tgt, w1, b1, w2, b2, gamma, beta, *,
              tile_rows=512, mxu_bf16=False):
    """FFNLayer.forward_post: LayerNorm(tgt + linear2(relu(linear1(tgt)))).

    tgt: (S, B, D). w1: (D, F), b1: (F,), w2: (F, D), b2/gamma/beta: (D,).
    mxu_bf16=True feeds the MXU in bf16 for f32 inputs (f32 accumulation) --
    a deliberate, small precision trade for 2-3x matmul rate on v6e/v7x.
    Returns (S, B, D) in tgt.dtype.
    """
    S, B, D = tgt.shape
    F = w1.shape[1]
    N = S * B

    if mxu_bf16:
        w1 = w1.astype(jnp.bfloat16)
        w2 = w2.astype(jnp.bfloat16)

    w_bytes = w1.dtype.itemsize
    x_bytes = tgt.dtype.itemsize

    single_buf = _single_buffer_supported()
    tf = _pick_f_tile(D, F, w_bytes)
    tm = _pick_tile_rows(N, tile_rows)
    # Shrink row tile until the VMEM estimate clears ~40 MiB (v7x headroom).
    while tm > 128 and _vmem_estimate(tm, D, F, tf, x_bytes, w_bytes,
                                      single_buf) > 40 * 1024 * 1024:
        tm = _round_up(tm // 2, 8)

    est = _vmem_estimate(tm, D, F, tf, x_bytes, w_bytes, single_buf)
    vmem_limit = min(56 * 1024 * 1024,
                     max(32 * 1024 * 1024, int(1.3 * est)))

    # No padding / slicing: partial trailing row block is masked by Pallas and
    # the reshape back only ever exposes the N valid rows.
    x2d = tgt.reshape(N, D)
    call = _build_call(N, D, F, tm, tf, tgt.dtype, single_buf, vmem_limit)
    out = call(x2d,
               w1,
               b1.reshape(1, F).astype(jnp.float32),
               w2,
               b2.reshape(1, D).astype(jnp.float32),
               gamma.reshape(1, D).astype(jnp.float32),
               beta.reshape(1, D).astype(jnp.float32))
    return out.reshape(S, B, D)


def xavier_uniform(key, fan_in, fan_out, shape):
    a = (6.0 / (fan_in + fan_out)) ** 0.5
    return jax.random.uniform(key, shape, jnp.float32, -a, a)


def _reference(x2d, w1, b1, w2, b2, gamma, beta):
    h = jnp.maximum(x2d @ w1 + b1, 0.0)
    t = x2d + (h @ w2 + b2)
    mu = jnp.mean(t, -1, keepdims=True)
    var = jnp.mean((t - mu) ** 2, -1, keepdims=True)
    return (t - mu) * jax.lax.rsqrt(var + LN_EPS) * gamma + beta


if __name__ == "__main__":
    # Small, lane-dense demo: d_model / dim_feedforward multiples of 128,
    # S*B = 512 rows -> four 128-row grid steps (both v7x TCs busy, pipelined).
    S, B, D, F = 128, 4, 128, 256     # seq, batch, d_model, dim_feedforward

    key = jax.random.PRNGKey(0)
    k_x, k_w1, k_b1, k_w2, k_b2 = jax.random.split(key, 5)

    tgt = jax.random.normal(k_x, (S, B, D), jnp.float32)

    # Linear weights xavier_uniform (as in _reset_parameters), biases small
    # uniform like the nn.Linear default; LayerNorm weight=1, bias=0.
    w1 = xavier_uniform(k_w1, D, F, (D, F))          # (in, out) layout
    b1 = jax.random.uniform(k_b1, (F,), jnp.float32,
                            -1.0 / D ** 0.5, 1.0 / D ** 0.5)
    w2 = xavier_uniform(k_w2, F, D, (F, D))
    b2 = jax.random.uniform(k_b2, (D,), jnp.float32,
                            -1.0 / F ** 0.5, 1.0 / F ** 0.5)
    gamma = jnp.ones((D,), jnp.float32)              # LayerNorm weight
    beta = jnp.zeros((D,), jnp.float32)              # LayerNorm bias

    ref = _reference(tgt.reshape(-1, D), w1, b1, w2, b2,
                     gamma, beta).reshape(S, B, D)

    # float32 path (f32 MXU feed).
    out = jax.block_until_ready(ffn_layer(tgt, w1, b1, w2, b2, gamma, beta))
    assert jnp.allclose(out, ref, atol=1e-2, rtol=1e-2), "f32 mismatch"

    # float32 inputs with bf16 MXU feed (accuracy flag).
    out_m = jax.block_until_ready(
        ffn_layer(tgt, w1, b1, w2, b2, gamma, beta, mxu_bf16=True))
    assert jnp.allclose(out_m, ref, atol=1e-1, rtol=1e-1), "mxu_bf16 mismatch"

    # bf16 activations + weights (matmuls at bf16 MXU rate, LN in f32).
    tgt_bf = tgt.astype(jnp.bfloat16)
    w1_bf = w1.astype(jnp.bfloat16)
    w2_bf = w2.astype(jnp.bfloat16)
    out_bf = jax.block_until_ready(
        ffn_layer(tgt_bf, w1_bf, b1, w2_bf, b2, gamma, beta))
    ref_bf = _reference(tgt_bf.astype(jnp.float32).reshape(-1, D),
                        w1_bf.astype(jnp.float32), b1,
                        w2_bf.astype(jnp.float32), b2,
                        gamma, beta).reshape(S, B, D)
    assert jnp.allclose(out_bf.astype(jnp.float32), ref_bf,
                        atol=1e-1, rtol=1e-1), "bf16 mismatch"

    print("KERNEL_OK")
</pallas_src>

<mosaic_0001>
module attributes {stable_mosaic.version = 11 : i64} {
  func.func @probe(%arg0: i32, %arg1: memref<8x128xf32, #tpu.memory_space<vmem>>, %arg2: memref<8x128xf32, #tpu.memory_space<vmem>>, %arg3: memref<8x128xf32, #tpu.memory_space<vmem>>) attributes {dimension_semantics = [#tpu.dimension_semantics<arbitrary>], iteration_bounds = array<i64: 2>, scalar_prefetch = 0 : i64, scratch_operands = 0 : i64, tpu.core_type = #tpu.core_type<tc>, window_params = [{pipeline_mode = #tpu.pipeline_mode<synchronous>, transform_indices = @transform_0, window_bounds = array<i64: 8, 128>}, {pipeline_mode = #tpu.pipeline_mode<synchronous>, transform_indices = @transform_1, window_bounds = array<i64: 8, 128>}, {pipeline_mode = #tpu.pipeline_mode<synchronous>, transform_indices = @transform_2, window_bounds = array<i64: 8, 128>}]} {
    %c0 = arith.constant 0 : index
    %c0_0 = arith.constant 0 : index
    %0 = vector.load %arg1[%c0, %c0_0] : memref<8x128xf32, #tpu.memory_space<vmem>>, vector<8x128xf32>
    %c0_1 = arith.constant 0 : index
    %c0_2 = arith.constant 0 : index
    %1 = vector.load %arg2[%c0_1, %c0_2] : memref<8x128xf32, #tpu.memory_space<vmem>>, vector<8x128xf32>
    %2 = arith.addf %0, %1 : vector<8x128xf32>
    %c0_3 = arith.constant 0 : index
    %c0_4 = arith.constant 0 : index
    %3 = vector.load %arg3[%c0_3, %c0_4] : memref<8x128xf32, #tpu.memory_space<vmem>>, vector<8x128xf32>
    tpu.vector_store %arg3[%c0_3, %c0_4], %2 {strides = array<i32>} : memref<8x128xf32, #tpu.memory_space<vmem>>, vector<8x128xf32>,
    return
  }
  func.func @transform_0(%arg0: i32) -> (i32, i32) {
    %c0_i32 = arith.constant 0 : i32
    %c0_i32_0 = arith.constant 0 : i32
    %c0_i32_1 = arith.constant 0 : i32
    return %c0_i32, %c0_i32_0 : i32, i32
  }
  func.func @transform_1(%arg0: i32) -> (i32, i32) {
    %c0_i32 = arith.constant 0 : i32
    %c0_i32_0 = arith.constant 0 : i32
    %c0_i32_1 = arith.constant 0 : i32
    return %c0_i32, %c0_i32_0 : i32, i32
  }
  func.func @transform_2(%arg0: i32) -> (i32, i32) {
    %c0_i32 = arith.constant 0 : i32
    %c0_i32_0 = arith.constant 0 : i32
    %c0_i32_1 = arith.constant 0 : i32
    return %c0_i32, %c0_i32_0 : i32, i32
  }
}

module attributes {stable_mosaic.version = 11 : i64} {
  func.func @ffn_kernel(%arg0: i32, %arg1: i32, %arg2: memref<128x128xf32, #tpu.memory_space<vmem>>, %arg3: memref<128x256xf32, #tpu.memory_space<vmem>>, %arg4: memref<1x256xf32, #tpu.memory_space<vmem>>, %arg5: memref<256x128xf32, #tpu.memory_space<vmem>>, %arg6: memref<1x128xf32, #tpu.memory_space<vmem>>, %arg7: memref<1x128xf32, #tpu.memory_space<vmem>>, %arg8: memref<1x128xf32, #tpu.memory_space<vmem>>, %arg9: memref<128x128xf32, #tpu.memory_space<vmem>>, %arg10: memref<128x128xf32, #tpu.memory_space<vmem>>) attributes {dimension_semantics = [#tpu.dimension_semantics<parallel>, #tpu.dimension_semantics<arbitrary>], iteration_bounds = array<i64: 4, 1>, scalar_prefetch = 0 : i64, scratch_operands = 1 : i64, tpu.core_type = #tpu.core_type<tc>, window_params = [{transform_indices = @transform_0, window_bounds = array<i64: 128, 128>}, {pipeline_mode = #tpu.pipeline_mode<synchronous>, transform_indices = @transform_1, window_bounds = array<i64: 128, 256>}, {pipeline_mode = #tpu.pipeline_mode<synchronous>, transform_indices = @transform_2, window_bounds = array<i64: 1, 256>}, {pipeline_mode = #tpu.pipeline_mode<synchronous>, transform_indices = @transform_3, window_bounds = array<i64: 256, 128>}, {pipeline_mode = #tpu.pipeline_mode<synchronous>, transform_indices = @transform_4, window_bounds = array<i64: 1, 128>}, {pipeline_mode = #tpu.pipeline_mode<synchronous>, transform_indices = @transform_5, window_bounds = array<i64: 1, 128>}, {pipeline_mode = #tpu.pipeline_mode<synchronous>, transform_indices = @transform_6, window_bounds = array<i64: 1, 128>}, {transform_indices = @transform_7, window_bounds = array<i64: 128, 128>}]} {
    %c0_i32 = arith.constant 0 : i32
    %0 = arith.cmpi eq, %arg1, %c0_i32 : i32
    %1 = arith.extui %0 : i1 to i32
    %c0_i32_0 = arith.constant 0 : i32
    %2 = arith.cmpi ne, %1, %c0_i32_0 : i32
    scf.if %2 {
      %cst_16 = arith.constant 0.000000e+00 : f32
      %19 = vector.broadcast %cst_16 : f32 to vector<128x128xf32>
      %c0_17 = arith.constant 0 : index
      %c0_18 = arith.constant 0 : index
      %20 = vector.load %arg10[%c0_17, %c0_18] : memref<128x128xf32, #tpu.memory_space<vmem>>, vector<128x128xf32>
      tpu.vector_store %arg10[%c0_17, %c0_18], %19 {strides = array<i32>} : memref<128x128xf32, #tpu.memory_space<vmem>>, vector<128x128xf32>,
    } else {
    }
    %c0 = arith.constant 0 : index
    %c0_1 = arith.constant 0 : index
    %3 = vector.load %arg2[%c0, %c0_1] : memref<128x128xf32, #tpu.memory_space<vmem>>, vector<128x128xf32>
    %c0_2 = arith.constant 0 : index
    %c0_3 = arith.constant 0 : index
    %4 = vector.load %arg3[%c0_2, %c0_3] : memref<128x256xf32, #tpu.memory_space<vmem>>, vector<128x256xf32>
    %cst = arith.constant dense<0.000000e+00> : vector<128x256xf32>
    %5 = tpu.matmul %3, %4, %cst {dimension_numbers = #tpu.dot_dimension_numbers<[1], [0], [0], [1], [0, 0, 1, 1], [], []>} : vector<128x128xf32>, vector<128x256xf32>, vector<128x256xf32> -> vector<128x256xf32>
    %c0_4 = arith.constant 0 : index
    %c0_5 = arith.constant 0 : index
    %6 = vector.load %arg4[%c0_4, %c0_5] : memref<1x256xf32, #tpu.memory_space<vmem>>, vector<1x256xf32>
    %7 = vector.broadcast %6 : vector<1x256xf32> to vector<128x256xf32>
    %8 = arith.addf %5, %7 : vector<128x256xf32>
    %cst_6 = arith.constant 0.000000e+00 : f32
    %9 = vector.broadcast %cst_6 : f32 to vector<128x256xf32>
    %10 = arith.maximumf %8, %9 : vector<128x256xf32>
    %c0_7 = arith.constant 0 : index
    %c0_8 = arith.constant 0 : index
    %11 = vector.load %arg10[%c0_7, %c0_8] : memref<128x128xf32, #tpu.memory_space<vmem>>, vector<128x128xf32>
    %c0_9 = arith.constant 0 : index
    %c0_10 = arith.constant 0 : index
    %12 = vector.load %arg5[%c0_9, %c0_10] : memref<256x128xf32, #tpu.memory_space<vmem>>, vector<256x128xf32>
    %cst_11 = arith.constant dense<0.000000e+00> : vector<128x128xf32>
    %13 = tpu.matmul %10, %12, %cst_11 {dimension_numbers = #tpu.dot_dimension_numbers<[1], [0], [0], [1], [0, 0, 1, 1], [], []>} : vector<128x256xf32>, vector<256x128xf32>, vector<128x128xf32> -> vector<128x128xf32>
    %14 = arith.addf %11, %13 : vector<128x128xf32>
    %c0_12 = arith.constant 0 : index
    %c0_13 = arith.constant 0 : index
    %15 = vector.load %arg10[%c0_12, %c0_13] : memref<128x128xf32, #tpu.memory_space<vmem>>, vector<128x128xf32>
    tpu.vector_store %arg10[%c0_12, %c0_13], %14 {strides = array<i32>} : memref<128x128xf32, #tpu.memory_space<vmem>>, vector<128x128xf32>,
    %c0_i32_14 = arith.constant 0 : i32
    %16 = arith.cmpi eq, %arg1, %c0_i32_14 : i32
    %17 = arith.extui %16 : i1 to i32
    %c0_i32_15 = arith.constant 0 : i32
    %18 = arith.cmpi ne, %17, %c0_i32_15 : i32
    scf.if %18 {
      %c0_16 = arith.constant 0 : index
      %c0_17 = arith.constant 0 : index
      %19 = vector.load %arg10[%c0_16, %c0_17] : memref<128x128xf32, #tpu.memory_space<vmem>>, vector<128x128xf32>
      %20 = arith.addf %3, %19 : vector<128x128xf32>
      %c0_18 = arith.constant 0 : index
      %c0_19 = arith.constant 0 : index
      %21 = vector.load %arg6[%c0_18, %c0_19] : memref<1x128xf32, #tpu.memory_space<vmem>>, vector<1x128xf32>
      %22 = vector.broadcast %21 : vector<1x128xf32> to vector<128x128xf32>
      %23 = arith.addf %20, %22 : vector<128x128xf32>
      %cst_20 = arith.constant dense<0.000000e+00> : vector<128xf32>
      %24 = vector.multi_reduction <add>, %23, %cst_20 [1] : vector<128x128xf32> to vector<128xf32>
      %25 = vector.shape_cast %24 : vector<128xf32> to vector<128x1xf32>
      %cst_21 = arith.constant 7.812500e-03 : f32
      %26 = vector.broadcast %cst_21 : f32 to vector<128x1xf32>
      %27 = arith.mulf %25, %26 : vector<128x1xf32>
      %28 = arith.mulf %23, %23 : vector<128x128xf32>
      %cst_22 = arith.constant dense<0.000000e+00> : vector<128xf32>
      %29 = vector.multi_reduction <add>, %28, %cst_22 [1] : vector<128x128xf32> to vector<128xf32>
      %30 = vector.shape_cast %29 : vector<128xf32> to vector<128x1xf32>
      %cst_23 = arith.constant 7.812500e-03 : f32
      %31 = vector.broadcast %cst_23 : f32 to vector<128x1xf32>
      %32 = arith.mulf %30, %31 : vector<128x1xf32>
      %33 = arith.mulf %27, %27 : vector<128x1xf32>
      %34 = arith.subf %32, %33 : vector<128x1xf32>
      %35 = vector.broadcast %27 : vector<128x1xf32> to vector<128x128xf32>
      %36 = arith.subf %23, %35 : vector<128x128xf32>
      %cst_24 = arith.constant 9.99999974E-6 : f32
      %37 = vector.broadcast %cst_24 : f32 to vector<128x1xf32>
      %38 = arith.addf %34, %37 : vector<128x1xf32>
      %39 = math.rsqrt %38 : vector<128x1xf32>
      %40 = vector.broadcast %39 : vector<128x1xf32> to vector<128x128xf32>
      %41 = arith.mulf %36, %40 : vector<128x128xf32>
      %c0_25 = arith.constant 0 : index
      %c0_26 = arith.constant 0 : index
      %42 = vector.load %arg7[%c0_25, %c0_26] : memref<1x128xf32, #tpu.memory_space<vmem>>, vector<1x128xf32>
      %43 = vector.broadcast %42 : vector<1x128xf32> to vector<128x128xf32>
      %44 = arith.mulf %41, %43 : vector<128x128xf32>
      %c0_27 = arith.constant 0 : index
      %c0_28 = arith.constant 0 : index
      %45 = vector.load %arg8[%c0_27, %c0_28] : memref<1x128xf32, #tpu.memory_space<vmem>>, vector<1x128xf32>
      %46 = vector.broadcast %45 : vector<1x128xf32> to vector<128x128xf32>
      %47 = arith.addf %44, %46 : vector<128x128xf32>
      %c0_29 = arith.constant 0 : index
      %c0_30 = arith.constant 0 : index
      %48 = vector.load %arg9[%c0_29, %c0_30] : memref<128x128xf32, #tpu.memory_space<vmem>>, vector<128x128xf32>
      tpu.vector_store %arg9[%c0_29, %c0_30], %47 {strides = array<i32>} : memref<128x128xf32, #tpu.memory_space<vmem>>, vector<128x128xf32>,
    } else {
    }
    return
  }
  func.func @transform_0(%arg0: i32, %arg1: i32) -> (i32, i32) {
    %c0_i32 = arith.constant 0 : i32
    %c0_i32_0 = arith.constant 0 : i32
    return %arg0, %c0_i32 : i32, i32
  }
  func.func @transform_1(%arg0: i32, %arg1: i32) -> (i32, i32) {
    %c0_i32 = arith.constant 0 : i32
    %c0_i32_0 = arith.constant 0 : i32
    %c0_i32_1 = arith.constant 0 : i32
    return %c0_i32, %c0_i32_0 : i32, i32
  }
  func.func @transform_2(%arg0: i32, %arg1: i32) -> (i32, i32) {
    %c0_i32 = arith.constant 0 : i32
    %c0_i32_0 = arith.constant 0 : i32
    %c0_i32_1 = arith.constant 0 : i32
    return %c0_i32, %c0_i32_0 : i32, i32
  }
  func.func @transform_3(%arg0: i32, %arg1: i32) -> (i32, i32) {
    %c0_i32 = arith.constant 0 : i32
    %c0_i32_0 = arith.constant 0 : i32
    %c0_i32_1 = arith.constant 0 : i32
    return %c0_i32, %c0_i32_0 : i32, i32
  }
  func.func @transform_4(%arg0: i32, %arg1: i32) -> (i32, i32) {
    %c0_i32 = arith.constant 0 : i32
    %c0_i32_0 = arith.constant 0 : i32
    %c0_i32_1 = arith.constant 0 : i32
    return %c0_i32, %c0_i32_0 : i32, i32
  }
  func.func @transform_5(%arg0: i32, %arg1: i32) -> (i32, i32) {
    %c0_i32 = arith.constant 0 : i32
    %c0_i32_0 = arith.constant 0 : i32
    %c0_i32_1 = arith.constant 0 : i32
    return %c0_i32, %c0_i32_0 : i32, i32
  }
  func.func @transform_6(%arg0: i32, %arg1: i32) -> (i32, i32) {
    %c0_i32 = arith.constant 0 : i32
    %c0_i32_0 = arith.constant 0 : i32
    %c0_i32_1 = arith.constant 0 : i32
    return %c0_i32, %c0_i32_0 : i32, i32
  }
  func.func @transform_7(%arg0: i32, %arg1: i32) -> (i32, i32) {
    %c0_i32 = arith.constant 0 : i32
    %c0_i32_0 = arith.constant 0 : i32
    return %arg0, %c0_i32 : i32, i32
  }
}

</mosaic_0001>

<llo_original>
// kernel: tpu_custom_call.1
$region0: #{tpu_custom_call.1}
  #allocation0 [shape = 'u32[]', space=smem, size = 0x4, offset = 0x4, fixed_abs, tag = 'smem constant byte address 0x4 - core index']
  #allocation1 [shape = 'u32[144,128]{1,0:T(1,128)}', space=vmem, size = 0x12000, scoped, tag = 'internal scratch']
  %s0 = inlined_call_operand.hbm [shape: f32[8,128], index: 0, kind: input, shape index: {}]
  %s1 = inlined_call_operand.hbm [shape: f32[8,128], index: 1, kind: input, shape index: {}]
  %s2 = inlined_call_operand.hbm [shape: f32[8,128], index: 2, kind: output, shape index: {}]
  %s3 = sld [smem:[#allocation0]]
  $region49: #{tpu_custom_call.1} parent=0
    _
  %s5 = ssub.s32 1, %s3
  %s6 = scalar_select 0, %s5, %s3
  $region1: #{tpu_custom_call.1} parent=0
    #allocation2 [shape = 'u8[4096]{0}', space=vmem, size = 0x1000, scoped, tag = 'input window, operand 0, single buffered']
    #allocation3 [shape = 's32[2]{0}', space=sflag, size = 0x8, scoped, tag = 'scoped memory for tpu_custom_call.1']
    #allocation4 [shape = 's32[2]{0}', space=sflag, size = 0x8, scoped, tag = 'scoped memory for tpu_custom_call.1']
    #allocation5 [shape = 'u8[4096]{0}', space=vmem, size = 0x1000, scoped, tag = 'input window, operand 1, single buffered']
    #allocation6 [shape = 's32[1]{0}', space=sflag, size = 0x4, scoped, tag = 'scoped memory for tpu_custom_call.1']
    #allocation7 [shape = 'u8[4096]{0}', space=vmem, size = 0x1000, scoped, tag = 'output window, operand 0, single buffered']
    %7 = vsyncpa [#allocation3], 0
    %8 = vsyncpa [#allocation6], 0
    %9 = vsyncpa [#allocation4], 0
    loop: start=0, step=1, limit=4
    $region2: #{tpu_custom_call.1} parent=1 // loop_pre_header
      _
    $region3: #{tpu_custom_call.1} parent=1 // loop_header
      %s11 = sphi 0, %s15
      %p12 = scmp.ge.s32.totalorder %s11, 4
      %s19 = sphi 0, %s19
      %s21 = sphi 0, %s19
      %s22 = sphi 0, %s21
      %s36 = sphi 0, %s22
      %s40 = sphi 0, %s40
      %s42 = sphi 0, %s40
      %s43 = sphi 0, %s42
      %s57 = sphi 0, %s43
      %s61 = sphi 0, %s61
      %s63 = sphi 0, %s61
      %s64 = sphi 0, %s63
      %s78 = sphi 0, %s64
    $region4: #{tpu_custom_call.1} parent=1 // loop_header_branch
      %14 = sbr.rel (%p12) target = $region8
    $region5: #{tpu_custom_call.1} parent=1 // loop_body
      %s16 = ssub.s32 %s11, 1
      %s17 = ssub.s32 %s11, 2
      %s18 = sadd.s32 %s11, 1
      %s20 = sadd.s32 %s19, 1
      %p23 = scmp.eq.s32.totalorder %s11, 1
      %p24 = scmp.ne.s32.totalorder %s19, %s21
      %p25 = scmp.eq.s32.totalorder %s11, 0
      %p26 = por %p24, %p25
      %p27 = scmp.ne.s32.totalorder %s19, %s21
      %p28 = scmp.eq.s32.totalorder %s16, 1
      %p29 = por %p27, %p28
      %p30 = scmp.ne.s32.totalorder %s21, %s22
      %p31 = scmp.eq.s32.totalorder %s16, 0
      %p32 = por %p30, %p31
      %p33 = scmp.ne.s32.totalorder %s21, %s22
      %p34 = scmp.eq.s32.totalorder %s17, 1
      %p35 = por %p33, %p34
      %p37 = scmp.ne.s32.totalorder %s22, %s36
      %p38 = scmp.eq.s32.totalorder %s17, 0
      %p39 = por %p37, %p38
      %s41 = sadd.s32 %s40, 1
      %p44 = scmp.eq.s32.totalorder %s11, 1
      %p45 = scmp.ne.s32.totalorder %s40, %s42
      %p46 = scmp.eq.s32.totalorder %s11, 0
      %p47 = por %p45, %p46
      %p48 = scmp.ne.s32.totalorder %s40, %s42
      %p49 = scmp.eq.s32.totalorder %s16, 1
      %p50 = por %p48, %p49
      %p51 = scmp.ne.s32.totalorder %s42, %s43
      %p52 = scmp.eq.s32.totalorder %s16, 0
      %p53 = por %p51, %p52
      %p54 = scmp.ne.s32.totalorder %s42, %s43
      %p55 = scmp.eq.s32.totalorder %s17, 1
      %p56 = por %p54, %p55
      %p58 = scmp.ne.s32.totalorder %s43, %s57
      %p59 = scmp.eq.s32.totalorder %s17, 0
      %p60 = por %p58, %p59
      %s62 = sadd.s32 %s61, 1
      %p65 = scmp.eq.s32.totalorder %s11, 1
      %p66 = scmp.ne.s32.totalorder %s61, %s63
      %p67 = scmp.eq.s32.totalorder %s11, 0
      %p68 = por %p66, %p67
      %p69 = scmp.ne.s32.totalorder %s61, %s63
      %p70 = scmp.eq.s32.totalorder %s16, 1
      %p71 = por %p69, %p70
      %p72 = scmp.ne.s32.totalorder %s63, %s64
      %p73 = scmp.eq.s32.totalorder %s16, 0
      %p74 = por %p72, %p73
      %p75 = scmp.ne.s32.totalorder %s63, %s64
      %p76 = scmp.eq.s32.totalorder %s17, 1
      %p77 = por %p75, %p76
      %p79 = scmp.ne.s32.totalorder %s64, %s78
      %p80 = scmp.eq.s32.totalorder %s17, 0
      %p81 = por %p79, %p80
      %p82 = scmp.le.s32.totalorder 1, %s11
      %p83 = scmp.lt.s32.totalorder %s11, 3
      %p84 = pnand %p82, %p83
      %p85 = pneg %p84
      // Predicated region
      $region9: #{tpu_custom_call.1} parent=5 // pred_check
        _
      $region10: #{tpu_custom_call.1} parent=5 // pred_check_branch
        %87 = sbr.rel (%p84) target = $region12
      $region11: #{tpu_custom_call.1} parent=5 // pred_region
        %s88 = ssub.s32 %s11, 1
        // Predicated region
        $region13: #{tpu_custom_call.1} parent=11 // pred_check
          %p89 = pneg %p32
        $region14: #{tpu_custom_call.1} parent=11 // pred_check_branch
          %91 = sbr.rel (%p89) target = $region16
        $region15: #{tpu_custom_call.1} parent=11 // pred_region
          %s93 = ssub.s32 128, 128
          %94 = vsyncadd [#allocation3], %s93
          %s96 = sshll.u32 [#allocation2], 4
          %s97 = int_to_ptr.vmem [resolvable:$true] %s96
          %99 = dma.hbm_to_vmem [thread:$0]  %s0, 128, %s97, [#allocation3]
        $region16: #{tpu_custom_call.1} parent=11 // pred_fallthru
          _
        // Predicated region
        $region17: #{tpu_custom_call.1} parent=11 // pred_check
          %p100 = pneg %p53
        $region18: #{tpu_custom_call.1} parent=11 // pred_check_branch
          %102 = sbr.rel (%p100) target = $region20
        $region19: #{tpu_custom_call.1} parent=11 // pred_region
          %s104 = ssub.s32 128, 128
          %105 = vsyncadd [#allocation6], %s104
          %s107 = sshll.u32 [#allocation5], 4
          %s108 = int_to_ptr.vmem [resolvable:$true] %s107
          %110 = dma.hbm_to_vmem [thread:$0]  %s1, 128, %s108, [#allocation6]
        $region20: #{tpu_custom_call.1} parent=11 // pred_fallthru
          _
      $region12: #{tpu_custom_call.1} parent=5 // pred_fallthru
        _
      %p111 = scmp.lt.s32.totalorder %s11, 2
      // Predicated region
      $region21: #{tpu_custom_call.1} parent=5 // pred_check
        %p112 = pneg %p111
      $region22: #{tpu_custom_call.1} parent=5 // pred_check_branch
        %114 = sbr.rel (%p112) target = $region24
      $region23: #{tpu_custom_call.1} parent=5 // pred_region
        _
      $region24: #{tpu_custom_call.1} parent=5 // pred_fallthru
        _
      %p115 = scmp.le.s32.totalorder 1, %s11
      %p116 = scmp.lt.s32.totalorder %s11, 3
      %p117 = pnand %p115, %p116
      %p118 = pneg %p117
      // Predicated region
      $region25: #{tpu_custom_call.1} parent=5 // pred_check
        _
      $region26: #{tpu_custom_call.1} parent=5 // pred_check_branch
        %120 = sbr.rel (%p117) target = $region28
      $region27: #{tpu_custom_call.1} parent=5 // pred_region
        %s121 = ssub.s32 %s11, 1
        // Predicated region
        $region29: #{tpu_custom_call.1} parent=27 // pred_check
          %p122 = pneg %p32
        $region30: #{tpu_custom_call.1} parent=27 // pred_check_branch
          %124 = sbr.rel (%p122) target = $region32
        $region31: #{tpu_custom_call.1} parent=27 // pred_region
          %125 = dma.done [#allocation3], 128
        $region32: #{tpu_custom_call.1} parent=27 // pred_fallthru
          _
        // Predicated region
        $region33: #{tpu_custom_call.1} parent=27 // pred_check
          %p126 = pneg %p53
        $region34: #{tpu_custom_call.1} parent=27 // pred_check_branch
          %128 = sbr.rel (%p126) target = $region36
        $region35: #{tpu_custom_call.1} parent=27 // pred_region
          %129 = dma.done [#allocation6], 128
        $region36: #{tpu_custom_call.1} parent=27 // pred_fallthru
          _
        %p130 = pneg %p32
        %p131 = pneg %p29
        %p132 = pneg %p53
        %p133 = pneg %p50
        %p134 = pneg %p74
        %p135 = pneg %p71
        %v136 = vld [vmem:[#allocation2] sm:$0xff]
        %v137 = vld [vmem:[#allocation5] sm:$0xff]
        %v138 = vadd.f32 %v136, %v137
        %139 = vst [vmem:[#allocation7] sm:$0xff] %v138
        // Predicated region
        $region37: #{tpu_custom_call.1} parent=27 // pred_check
          %p140 = pneg %p71
        $region38: #{tpu_custom_call.1} parent=27 // pred_check_branch
          %142 = sbr.rel (%p140) target = $region40
        $region39: #{tpu_custom_call.1} parent=27 // pred_region
          %s144 = ssub.s32 128, 128
          %145 = vsyncadd [#allocation4], %s144
          %s147 = sshll.u32 [#allocation7], 4
          %s148 = int_to_ptr.vmem [resolvable:$true] %s147
          %150 = dma.vmem_to_hbm [thread:$0]  %s148, 128, %s2, [#allocation4]
        $region40: #{tpu_custom_call.1} parent=27 // pred_fallthru
          _
        // Predicated region
        $region41: #{tpu_custom_call.1} parent=27 // pred_check
          %p151 = pneg %p71
        $region42: #{tpu_custom_call.1} parent=27 // pred_check_branch
          %153 = sbr.rel (%p151) target = $region44
        $region43: #{tpu_custom_call.1} parent=27 // pred_region
          %154 = dma.done [#allocation4], 128
        $region44: #{tpu_custom_call.1} parent=27 // pred_fallthru
          _
      $region28: #{tpu_custom_call.1} parent=5 // pred_fallthru
        _
      %p155 = scmp.le.s32.totalorder 2, %s11
      // Predicated region
      $region45: #{tpu_custom_call.1} parent=5 // pred_check
        %p156 = pneg %p155
      $region46: #{tpu_custom_call.1} parent=5 // pred_check_branch
        %158 = sbr.rel (%p156) target = $region48
      $region47: #{tpu_custom_call.1} parent=5 // pred_region
        %s159 = ssub.s32 %s11, 2
      $region48: #{tpu_custom_call.1} parent=5 // pred_fallthru
        _
    $region6: #{tpu_custom_call.1} parent=1 // loop_footer
      %s15 = sadd.s32 1, %s11
    $region7: #{tpu_custom_call.1} parent=1 // loop_footer_branch
      %10 = sbr.rel target = $region3
    $region8: #{tpu_custom_call.1} parent=1 // loop_exit
      _
    %160 = vsyncpa [#allocation3], 1
    %s161 = scalar_lea.sflag [#allocation3], 1
    %162 = vsyncpa %s161, 1
    %163 = vsyncpa [#allocation6], 1
    %164 = vsyncpa [#allocation4], 1
    %s165 = scalar_lea.sflag [#allocation4], 1
    %166 = vsyncpa %s165, 1

// kernel: tpu_custom_call.1
$region0: #{tpu_custom_call.1}
  #allocation0 [shape = 'u32[]', space=smem, size = 0x4, offset = 0x4, fixed_abs, tag = 'smem constant byte address 0x4 - core index']
  #allocation1 [shape = 'u32[144,128]{1,0:T(1,128)}', space=vmem, size = 0x12000, scoped, tag = 'internal scratch']
  #allocation2 [shape = 'f32[128,128]{1,0:T(8,128)}', space=vmem, size = 0x10000, scoped, tag = 'scratch operand']
  %s0 = inlined_call_operand.hbm [shape: f32[512,128], index: 0, kind: input, shape index: {}]
  %s1 = inlined_call_operand.hbm [shape: f32[128,256], index: 1, kind: input, shape index: {}]
  %s2 = inlined_call_operand.vmem [shape: f32[1,256], index: 2, kind: input, shape index: {}]
  %s3 = inlined_call_operand.hbm [shape: f32[256,128], index: 3, kind: input, shape index: {}]
  %s4 = inlined_call_operand.vmem [shape: f32[1,128], index: 4, kind: input, shape index: {}]
  %s5 = inlined_call_operand.vmem [shape: f32[1,128], index: 5, kind: input, shape index: {}]
  %s6 = inlined_call_operand.vmem [shape: f32[1,128], index: 6, kind: input, shape index: {}]
  %s7 = inlined_call_operand.hbm [shape: f32[512,128], index: 7, kind: output, shape index: {}]
  %s8 = sld [smem:[#allocation0]]
  $region81: #{tpu_custom_call.1} parent=0
    _
  %s10 = ssub.s32 1, %s8
  %s11 = scalar_select 0, %s10, %s8
  $region1: #{tpu_custom_call.1} parent=0
    #allocation3 [shape = 'u8[131072]{0}', space=vmem, size = 0x20000, scoped, tag = 'input window, operand 0']
    #allocation4 [shape = 's32[2]{0}', space=sflag, size = 0x8, scoped, tag = 'scoped memory for tpu_custom_call.1']
    #allocation5 [shape = 's32[2]{0}', space=sflag, size = 0x8, scoped, tag = 'scoped memory for tpu_custom_call.1']
    #allocation6 [shape = 'u8[131072]{0}', space=vmem, size = 0x20000, scoped, tag = 'input window, operand 1, single buffered']
    #allocation7 [shape = 's32[1]{0}', space=sflag, size = 0x4, scoped, tag = 'scoped memory for tpu_custom_call.1']
    #allocation8 [shape = 'u8[131072]{0}', space=vmem, size = 0x20000, scoped, tag = 'input window, operand 3, single buffered']
    #allocation9 [shape = 'u8[131072]{0}', space=vmem, size = 0x20000, scoped, tag = 'output window, operand 0']
    %12 = vsyncpa [#allocation4], 0
    %s13 = scalar_lea.sflag [#allocation4], 1
    %14 = vsyncpa %s13, 0
    %15 = vsyncpa [#allocation7], 0
    %16 = vsyncpa [#allocation5], 0
    %s17 = scalar_lea.sflag [#allocation5], 1
    %18 = vsyncpa %s17, 0
    loop: start=0, step=1, limit=6
    $region2: #{tpu_custom_call.1} parent=1 // loop_pre_header
      _
    $region3: #{tpu_custom_call.1} parent=1 // loop_header
      %s20 = sphi 0, %s24
      %p21 = scmp.ge.s32.totalorder %s20, 6
      %s27 = sphi 0, %s39
      %s28 = sphi 0, %s35
      %s29 = sphi 0, %s27
      %s30 = sphi 0, %s28
      %s31 = sphi 0, %s29
      %s32 = sphi 0, %s30
      %s42 = sphi 0, %s44
      %s45 = sphi 0, %s42
      %s46 = sphi 0, %s45
      %s62 = sphi 0, %s46
      %s66 = sphi 0, %s66
      %s68 = sphi 0, %s66
      %s69 = sphi 0, %s68
      %s83 = sphi 0, %s69
      %s87 = sphi 0, %s87
      %s89 = sphi 0, %s87
      %s90 = sphi 0, %s89
      %s104 = sphi 0, %s90
      %s108 = sphi 0, %s108
      %s110 = sphi 0, %s108
      %s111 = sphi 0, %s110
      %s125 = sphi 0, %s111
      %s129 = sphi 0, %s129
      %s131 = sphi 0, %s129
      %s132 = sphi 0, %s131
      %s146 = sphi 0, %s132
      %s150 = sphi 0, %s150
      %s152 = sphi 0, %s150
      %s153 = sphi 0, %s152
      %s167 = sphi 0, %s153
      %s171 = sphi 0, %s171
      %s173 = sphi 0, %s171
      %s174 = sphi 0, %s173
      %s188 = sphi 0, %s174
      %s194 = sphi 0, %s196
      %s197 = sphi 0, %s194
      %s198 = sphi 0, %s197
      %s214 = sphi 0, %s198
    $region4: #{tpu_custom_call.1} parent=1 // loop_header_branch
      %23 = sbr.rel (%p21) target = $region8
    $region5: #{tpu_custom_call.1} parent=1 // loop_body
      %s25 = ssub.s32 %s20, 1
      %s26 = ssub.s32 %s20, 2
      %s33 = sadd.s32 1, %s28
      %p34 = scmp.ge.s32.totalorder %s33, 1
      %s35 = scalar_select %p34, 0, %s33
      %s36 = sadd.s32 1, %s27
      %s37 = scalar_select %p34, %s36, %s27
      %p38 = scmp.ge.s32.totalorder %s37, 4
      %s39 = scalar_select %p38, 0, %s37
      %s40 = ssub.s32 %s27, %s39
      %p41 = scmp.eq.s32.totalorder %s40, 0
      %s43 = sadd.s32 %s42, 1
      %s44 = scalar_select %p41, %s42, %s43
      %p47 = pneg %p41
      %p48 = scmp.eq.s32.totalorder %s20, 3
      %p49 = por %p47, %p48
      %p50 = scmp.ne.s32.totalorder %s42, %s45
      %p51 = scmp.eq.s32.totalorder %s20, 0
      %p52 = por %p50, %p51
      %p53 = scmp.ne.s32.totalorder %s42, %s45
      %p54 = scmp.eq.s32.totalorder %s25, 3
      %p55 = por %p53, %p54
      %p56 = scmp.ne.s32.totalorder %s45, %s46
      %p57 = scmp.eq.s32.totalorder %s25, 0
      %p58 = por %p56, %p57
      %p59 = scmp.ne.s32.totalorder %s45, %s46
      %p60 = scmp.eq.s32.totalorder %s26, 3
      %p61 = por %p59, %p60
      %p63 = scmp.ne.s32.totalorder %s46, %s62
      %p64 = scmp.eq.s32.totalorder %s26, 0
      %p65 = por %p63, %p64
      %s67 = sadd.s32 %s66, 1
      %p70 = scmp.eq.s32.totalorder %s20, 3
      %p71 = scmp.ne.s32.totalorder %s66, %s68
      %p72 = scmp.eq.s32.totalorder %s20, 0
      %p73 = por %p71, %p72
      %p74 = scmp.ne.s32.totalorder %s66, %s68
      %p75 = scmp.eq.s32.totalorder %s25, 3
      %p76 = por %p74, %p75
      %p77 = scmp.ne.s32.totalorder %s68, %s69
      %p78 = scmp.eq.s32.totalorder %s25, 0
      %p79 = por %p77, %p78
      %p80 = scmp.ne.s32.totalorder %s68, %s69
      %p81 = scmp.eq.s32.totalorder %s26, 3
      %p82 = por %p80, %p81
      %p84 = scmp.ne.s32.totalorder %s69, %s83
      %p85 = scmp.eq.s32.totalorder %s26, 0
      %p86 = por %p84, %p85
      %s88 = sadd.s32 %s87, 1
      %p91 = scmp.eq.s32.totalorder %s20, 3
      %p92 = scmp.ne.s32.totalorder %s87, %s89
      %p93 = scmp.eq.s32.totalorder %s20, 0
      %p94 = por %p92, %p93
      %p95 = scmp.ne.s32.totalorder %s87, %s89
      %p96 = scmp.eq.s32.totalorder %s25, 3
      %p97 = por %p95, %p96
      %p98 = scmp.ne.s32.totalorder %s89, %s90
      %p99 = scmp.eq.s32.totalorder %s25, 0
      %p100 = por %p98, %p99
      %p101 = scmp.ne.s32.totalorder %s89, %s90
      %p102 = scmp.eq.s32.totalorder %s26, 3
      %p103 = por %p101, %p102
      %p105 = scmp.ne.s32.totalorder %s90, %s104
      %p106 = scmp.eq.s32.totalorder %s26, 0
      %p107 = por %p105, %p106
      %s109 = sadd.s32 %s108, 1
      %p112 = scmp.eq.s32.totalorder %s20, 3
      %p113 = scmp.ne.s32.totalorder %s108, %s110
      %p114 = scmp.eq.s32.totalorder %s20, 0
      %p115 = por %p113, %p114
      %p116 = scmp.ne.s32.totalorder %s108, %s110
      %p117 = scmp.eq.s32.totalorder %s25, 3
      %p118 = por %p116, %p117
      %p119 = scmp.ne.s32.totalorder %s110, %s111
      %p120 = scmp.eq.s32.totalorder %s25, 0
      %p121 = por %p119, %p120
      %p122 = scmp.ne.s32.totalorder %s110, %s111
      %p123 = scmp.eq.s32.totalorder %s26, 3
      %p124 = por %p122, %p123
      %p126 = scmp.ne.s32.totalorder %s111, %s125
      %p127 = scmp.eq.s32.totalorder %s26, 0
      %p128 = por %p126, %p127
      %s130 = sadd.s32 %s129, 1
      %p133 = scmp.eq.s32.totalorder %s20, 3
      %p134 = scmp.ne.s32.totalorder %s129, %s131
      %p135 = scmp.eq.s32.totalorder %s20, 0
      %p136 = por %p134, %p135
      %p137 = scmp.ne.s32.totalorder %s129, %s131
      %p138 = scmp.eq.s32.totalorder %s25, 3
      %p139 = por %p137, %p138
      %p140 = scmp.ne.s32.totalorder %s131, %s132
      %p141 = scmp.eq.s32.totalorder %s25, 0
      %p142 = por %p140, %p141
      %p143 = scmp.ne.s32.totalorder %s131, %s132
      %p144 = scmp.eq.s32.totalorder %s26, 3
      %p145 = por %p143, %p144
      %p147 = scmp.ne.s32.totalorder %s132, %s146
      %p148 = scmp.eq.s32.totalorder %s26, 0
      %p149 = por %p147, %p148
      %s151 = sadd.s32 %s150, 1
      %p154 = scmp.eq.s32.totalorder %s20, 3
      %p155 = scmp.ne.s32.totalorder %s150, %s152
      %p156 = scmp.eq.s32.totalorder %s20, 0
      %p157 = por %p155, %p156
      %p158 = scmp.ne.s32.totalorder %s150, %s152
      %p159 = scmp.eq.s32.totalorder %s25, 3
      %p160 = por %p158, %p159
      %p161 = scmp.ne.s32.totalorder %s152, %s153
      %p162 = scmp.eq.s32.totalorder %s25, 0
      %p163 = por %p161, %p162
      %p164 = scmp.ne.s32.totalorder %s152, %s153
      %p165 = scmp.eq.s32.totalorder %s26, 3
      %p166 = por %p164, %p165
      %p168 = scmp.ne.s32.totalorder %s153, %s167
      %p169 = scmp.eq.s32.totalorder %s26, 0
      %p170 = por %p168, %p169
      %s172 = sadd.s32 %s171, 1
      %p175 = scmp.eq.s32.totalorder %s20, 3
      %p176 = scmp.ne.s32.totalorder %s171, %s173
      %p177 = scmp.eq.s32.totalorder %s20, 0
      %p178 = por %p176, %p177
      %p179 = scmp.ne.s32.totalorder %s171, %s173
      %p180 = scmp.eq.s32.totalorder %s25, 3
      %p181 = por %p179, %p180
      %p182 = scmp.ne.s32.totalorder %s173, %s174
      %p183 = scmp.eq.s32.totalorder %s25, 0
      %p184 = por %p182, %p183
      %p185 = scmp.ne.s32.totalorder %s173, %s174
      %p186 = scmp.eq.s32.totalorder %s26, 3
      %p187 = por %p185, %p186
      %p189 = scmp.ne.s32.totalorder %s174, %s188
      %p190 = scmp.eq.s32.totalorder %s26, 0
      %p191 = por %p189, %p190
      %s192 = ssub.s32 %s27, %s39
      %p193 = scmp.eq.s32.totalorder %s192, 0
      %s195 = sadd.s32 %s194, 1
      %s196 = scalar_select %p193, %s194, %s195
      %p199 = pneg %p193
      %p200 = scmp.eq.s32.totalorder %s20, 3
      %p201 = por %p199, %p200
      %p202 = scmp.ne.s32.totalorder %s194, %s197
      %p203 = scmp.eq.s32.totalorder %s20, 0
      %p204 = por %p202, %p203
      %p205 = scmp.ne.s32.totalorder %s194, %s197
      %p206 = scmp.eq.s32.totalorder %s25, 3
      %p207 = por %p205, %p206
      %p208 = scmp.ne.s32.totalorder %s197, %s198
      %p209 = scmp.eq.s32.totalorder %s25, 0
      %p210 = por %p208, %p209
      %p211 = scmp.ne.s32.totalorder %s197, %s198
      %p212 = scmp.eq.s32.totalorder %s26, 3
      %p213 = por %p211, %p212
      %p215 = scmp.ne.s32.totalorder %s198, %s214
      %p216 = scmp.eq.s32.totalorder %s26, 0
      %p217 = por %p215, %p216
      %p218 = scmp.le.s32.totalorder 1, %s20
      %p219 = scmp.lt.s32.totalorder %s20, 5
      %p220 = pnand %p218, %p219
      %p221 = pneg %p220
      // Predicated region
      $region9: #{tpu_custom_call.1} parent=5 // pred_check
        _
      $region10: #{tpu_custom_call.1} parent=5 // pred_check_branch
        %223 = sbr.rel (%p220) target = $region12
      $region11: #{tpu_custom_call.1} parent=5 // pred_region
        %s224 = ssub.s32 %s20, 1
        // Predicated region
        $region13: #{tpu_custom_call.1} parent=11 // pred_check
          %p225 = pneg %p79
        $region14: #{tpu_custom_call.1} parent=11 // pred_check_branch
          %227 = sbr.rel (%p225) target = $region16
        $region15: #{tpu_custom_call.1} parent=11 // pred_region
          %s229 = ssub.s32 4096, 4096
          %230 = vsyncadd [#allocation7], %s229
          %s231 = sshll.u32 [#allocation6], 4
          %s232 = int_to_ptr.vmem [resolvable:$true] %s231
          %237 = dma.hbm_to_vmem [thread:$0]  %s1, 4096, %s232, [#allocation7], 256, 256, 16
        $region16: #{tpu_custom_call.1} parent=11 // pred_fallthru
          _
        // Predicated region
        $region17: #{tpu_custom_call.1} parent=11 // pred_check
          %p238 = pneg %p100
        $region18: #{tpu_custom_call.1} parent=11 // pred_check_branch
          %240 = sbr.rel (%p238) target = $region20
        $region19: #{tpu_custom_call.1} parent=11 // pred_region
          _
        $region20: #{tpu_custom_call.1} parent=11 // pred_fallthru
          _
        // Predicated region
        $region21: #{tpu_custom_call.1} parent=11 // pred_check
          %p241 = pneg %p121
        $region22: #{tpu_custom_call.1} parent=11 // pred_check_branch
          %243 = sbr.rel (%p241) target = $region24
        $region23: #{tpu_custom_call.1} parent=11 // pred_region
          %s245 = ssub.s32 4096, 4096
          %246 = vsyncadd [#allocation7], %s245
          %s247 = sshll.u32 [#allocation8], 4
          %s248 = int_to_ptr.vmem [resolvable:$true] %s247
          %253 = dma.hbm_to_vmem [thread:$0]  %s3, 4096, %s248, [#allocation7], 128, 128, 8
        $region24: #{tpu_custom_call.1} parent=11 // pred_fallthru
          _
        // Predicated region
        $region25: #{tpu_custom_call.1} parent=11 // pred_check
          %p254 = pneg %p142
        $region26: #{tpu_custom_call.1} parent=11 // pred_check_branch
          %256 = sbr.rel (%p254) target = $region28
        $region27: #{tpu_custom_call.1} parent=11 // pred_region
          _
        $region28: #{tpu_custom_call.1} parent=11 // pred_fallthru
          _
        // Predicated region
        $region29: #{tpu_custom_call.1} parent=11 // pred_check
          %p257 = pneg %p163
        $region30: #{tpu_custom_call.1} parent=11 // pred_check_branch
          %259 = sbr.rel (%p257) target = $region32
        $region31: #{tpu_custom_call.1} parent=11 // pred_region
          _
        $region32: #{tpu_custom_call.1} parent=11 // pred_fallthru
          _
        // Predicated region
        $region33: #{tpu_custom_call.1} parent=11 // pred_check
          %p260 = pneg %p184
        $region34: #{tpu_custom_call.1} parent=11 // pred_check_branch
          %262 = sbr.rel (%p260) target = $region36
        $region35: #{tpu_custom_call.1} parent=11 // pred_region
          _
        $region36: #{tpu_custom_call.1} parent=11 // pred_fallthru
          _
      $region12: #{tpu_custom_call.1} parent=5 // pred_fallthru
        _
      %p263 = scmp.lt.s32.totalorder %s20, 4
      // Predicated region
      $region37: #{tpu_custom_call.1} parent=5 // pred_check
        %p264 = pneg %p263
      $region38: #{tpu_custom_call.1} parent=5 // pred_check_branch
        %266 = sbr.rel (%p264) target = $region40
      $region39: #{tpu_custom_call.1} parent=5 // pred_region
        // Predicated region
        $region41: #{tpu_custom_call.1} parent=39 // pred_check
          %p267 = pneg %p52
        $region42: #{tpu_custom_call.1} parent=39 // pred_check_branch
          %269 = sbr.rel (%p267) target = $region44
        $region43: #{tpu_custom_call.1} parent=39 // pred_region
          %s270 = sand.u32 %s42, 1
          %s271 = scalar_lea.sflag [#allocation4], %s270
          %s272 = sand.u32 %s42, 1
          %s273 = smul.addr %s272, 128
          %s274 = scalar_lea.vmem [#allocation3], %s273
          %s275 = smul.u32 16, %s27
          %s277 = ssub.s32 2048, 2048
          %278 = vsyncadd %s271, %s277
          %s279 = smul.addr %s275, 128
          %s280 = scalar_lea.hbm %s0, %s279
          %s281 = sshll.u32 %s274, 4
          %s282 = int_to_ptr.vmem [resolvable:$true] %s281
          %287 = dma.hbm_to_vmem [thread:$0]  %s280, 2048, %s282, %s271, 128, 128, 8
        $region44: #{tpu_custom_call.1} parent=39 // pred_fallthru
          _
      $region40: #{tpu_custom_call.1} parent=5 // pred_fallthru
        _
      %p288 = scmp.le.s32.totalorder 1, %s20
      %p289 = scmp.lt.s32.totalorder %s20, 5
      %p290 = pnand %p288, %p289
      %p291 = pneg %p290
      // Predicated region
      $region45: #{tpu_custom_call.1} parent=5 // pred_check
        _
      $region46: #{tpu_custom_call.1} parent=5 // pred_check_branch
        %293 = sbr.rel (%p290) target = $region48
      $region47: #{tpu_custom_call.1} parent=5 // pred_region
        %s294 = ssub.s32 %s20, 1
        %s295 = sand.u32 %s45, 1
        %s296 = scalar_lea.sflag [#allocation4], %s295
        %s297 = sand.u32 %s45, 1
        %s298 = smul.addr %s297, 128
        %s299 = scalar_lea.vmem [#allocation3], %s298
        // Predicated region
        $region49: #{tpu_custom_call.1} parent=47 // pred_check
          %p300 = pneg %p58
        $region50: #{tpu_custom_call.1} parent=47 // pred_check_branch
          %302 = sbr.rel (%p300) target = $region52
        $region51: #{tpu_custom_call.1} parent=47 // pred_region
          %303 = dma.done %s296, 2048
        $region52: #{tpu_custom_call.1} parent=47 // pred_fallthru
          _
        // Predicated region
        $region53: #{tpu_custom_call.1} parent=47 // pred_check
          %p304 = pneg %p79
        $region54: #{tpu_custom_call.1} parent=47 // pred_check_branch
          %306 = sbr.rel (%p304) target = $region56
        $region55: #{tpu_custom_call.1} parent=47 // pred_region
          %307 = dma.done [#allocation7], 4096
        $region56: #{tpu_custom_call.1} parent=47 // pred_fallthru
          _
        // Predicated region
        $region57: #{tpu_custom_call.1} parent=47 // pred_check
          %p308 = pneg %p121
        $region58: #{tpu_custom_call.1} parent=47 // pred_check_branch
          %310 = sbr.rel (%p308) target = $region60
        $region59: #{tpu_custom_call.1} parent=47 // pred_region
          %311 = dma.done [#allocation7], 4096
        $region60: #{tpu_custom_call.1} parent=47 // pred_fallthru
          _
        %s312 = sand.u32 %s45, 1
        %s313 = scalar_lea.sflag [#allocation4], %s312
        %s314 = sand.u32 %s45, 1
        %s315 = smul.addr %s314, 128
        %s316 = scalar_lea.vmem [#allocation3], %s315
        %p317 = pneg %p58
        %p318 = pneg %p55
        %p319 = pneg %p79
        %p320 = pneg %p76
        %p321 = pneg %p100
        %p322 = pneg %p97
        %p323 = pneg %p121
        %p324 = pneg %p118
        %p325 = pneg %p142
        %p326 = pneg %p139
        %p327 = pneg %p163
        %p328 = pneg %p160
        %p329 = pneg %p184
        %p330 = pneg %p181
        %p331 = pneg %p210
        %p332 = pneg %p207
        %s333 = sand.u32 %s197, 1
        %s334 = scalar_lea.sflag [#allocation5], %s333
        %s335 = sand.u32 %s197, 1
        %s336 = smul.addr %s335, 128
        %s337 = scalar_lea.vmem [#allocation9], %s336
        %s338 = smul.u32 16, %s29
        %s339 = smul.u32 16, %s29
        %p340 = scmp.eq.s32.totalorder %s30, 0
        // Predicated region
        $region61: #{tpu_custom_call.1} parent=47 // pred_check
          %p341 = pneg %p340
        $region62: #{tpu_custom_call.1} parent=47 // pred_check_branch
          %343 = sbr.rel (%p341) target = $region64
        $region63: #{tpu_custom_call.1} parent=47 // pred_region
          %344 = vst [vmem:[#allocation2] sm:$0xff] 0.0
          %345 = vst [vmem:[#allocation2 + $0x8] sm:$0xff] 0.0
          %346 = vst [vmem:[#allocation2 + $0x10] sm:$0xff] 0.0
          %347 = vst [vmem:[#allocation2 + $0x18] sm:$0xff] 0.0
          %348 = vst [vmem:[#allocation2 + $0x20] sm:$0xff] 0.0
          %349 = vst [vmem:[#allocation2 + $0x28] sm:$0xff] 0.0
          %350 = vst [vmem:[#allocation2 + $0x30] sm:$0xff] 0.0
          %351 = vst [vmem:[#allocation2 + $0x38] sm:$0xff] 0.0
          %352 = vst [vmem:[#allocation2 + $0x40] sm:$0xff] 0.0
          %353 = vst [vmem:[#allocation2 + $0x48] sm:$0xff] 0.0
          %354 = vst [vmem:[#allocation2 + $0x50] sm:$0xff] 0.0
          %355 = vst [vmem:[#allocation2 + $0x58] sm:$0xff] 0.0
          %356 = vst [vmem:[#allocation2 + $0x60] sm:$0xff] 0.0
          %357 = vst [vmem:[#allocation2 + $0x68] sm:$0xff] 0.0
          %358 = vst [vmem:[#allocation2 + $0x70] sm:$0xff] 0.0
          %359 = vst [vmem:[#allocation2 + $0x78] sm:$0xff] 0.0
        $region64: #{tpu_custom_call.1} parent=47 // pred_fallthru
          _
        %v360 = vld [vmem:[%s299] sm:$0xff]
        %v361 = vld [vmem:[%s299 + $0x8] sm:$0xff]
        %v362 = vld [vmem:[%s299 + $0x10] sm:$0xff]
        %v363 = vld [vmem:[%s299 + $0x18] sm:$0xff]
        %v364 = vld [vmem:[%s299 + $0x20] sm:$0xff]
        %v365 = vld [vmem:[%s299 + $0x28] sm:$0xff]
        %v366 = vld [vmem:[%s299 + $0x30] sm:$0xff]
        %v367 = vld [vmem:[%s299 + $0x38] sm:$0xff]
        %v368 = vld [vmem:[%s299 + $0x40] sm:$0xff]
        %v369 = vld [vmem:[%s299 + $0x48] sm:$0xff]
        %v370 = vld [vmem:[%s299 + $0x50] sm:$0xff]
        %v371 = vld [vmem:[%s299 + $0x58] sm:$0xff]
        %v372 = vld [vmem:[%s299 + $0x60] sm:$0xff]
        %v373 = vld [vmem:[%s299 + $0x68] sm:$0xff]
        %v374 = vld [vmem:[%s299 + $0x70] sm:$0xff]
        %v375 = vld [vmem:[%s299 + $0x78] sm:$0xff]
        %v376 = vld [vmem:[#allocation6] sm:$0xff]
        %v377 = vld [vmem:[#allocation6 + $0x8] sm:$0xff]
        %v378 = vld [vmem:[#allocation6 + $0x10] sm:$0xff]
        %v379 = vld [vmem:[#allocation6 + $0x18] sm:$0xff]
        %v380 = vld [vmem:[#allocation6 + $0x20] sm:$0xff]
        %v381 = vld [vmem:[#allocation6 + $0x28] sm:$0xff]
        %v382 = vld [vmem:[#allocation6 + $0x30] sm:$0xff]
        %v383 = vld [vmem:[#allocation6 + $0x38] sm:$0xff]
        %v384 = vld [vmem:[#allocation6 + $0x40] sm:$0xff]
        %v385 = vld [vmem:[#allocation6 + $0x48] sm:$0xff]
        %v386 = vld [vmem:[#allocation6 + $0x50] sm:$0xff]
        %v387 = vld [vmem:[#allocation6 + $0x58] sm:$0xff]
        %v388 = vld [vmem:[#allocation6 + $0x60] sm:$0xff]
        %v389 = vld [vmem:[#allocation6 + $0x68] sm:$0xff]
        %v390 = vld [vmem:[#allocation6 + $0x70] sm:$0xff]
        %v391 = vld [vmem:[#allocation6 + $0x78] sm:$0xff]
        %v392 = vld [vmem:[#allocation6 + $0x80] sm:$0xff]
        %v393 = vld [vmem:[#allocation6 + $0x88] sm:$0xff]
        %v394 = vld [vmem:[#allocation6 + $0x90] sm:$0xff]
        %v395 = vld [vmem:[#allocation6 + $0x98] sm:$0xff]
        %v396 = vld [vmem:[#allocation6 + $0xa0] sm:$0xff]
        %v397 = vld [vmem:[#allocation6 + $0xa8] sm:$0xff]
        %v398 = vld [vmem:[#allocation6 + $0xb0] sm:$0xff]
        %v399 = vld [vmem:[#allocation6 + $0xb8] sm:$0xff]
        %v400 = vld [vmem:[#allocation6 + $0xc0] sm:$0xff]
        %v401 = vld [vmem:[#allocation6 + $0xc8] sm:$0xff]
        %v402 = vld [vmem:[#allocation6 + $0xd0] sm:$0xff]
        %v403 = vld [vmem:[#allocation6 + $0xd8] sm:$0xff]
        %v404 = vld [vmem:[#allocation6 + $0xe0] sm:$0xff]
        %v405 = vld [vmem:[#allocation6 + $0xe8] sm:$0xff]
        %v406 = vld [vmem:[#allocation6 + $0xf0] sm:$0xff]
        %v407 = vld [vmem:[#allocation6 + $0xf8] sm:$0xff]
        %v408 = vld [vmem:[%s2] sm:$0x3]
        %v410 = vlaneseq
        %v411 = vshrl.u32 %v410, 7
        %v412 = vsub.s32 0, %v411
        %v413 = vrot.slane %v408, %v412
        %v414 = vlaneseq
        %v415 = vshrl.u32 %v414, 7
        %v416 = vsub.s32 1, %v415
        %v417 = vrot.slane %v408, %v416
        %420 = vmatprep.subr.mxu0 %v377
        %421 = vmatpush1.msra.mxu0 %v376
        %422 = vmatprep.subr.mxu0 %v379
        %423 = vmatpush1.msra.mxu0 %v378
        %424 = vmatprep.subr.mxu0 %v381
        %425 = vmatpush1.msra.mxu0 %v380
        %426 = vmatprep.subr.mxu0 %v383
        %427 = vmatpush1.msra.mxu0 %v382
        %428 = vmatprep.subr.mxu0 %v385
        %429 = vmatpush1.msra.mxu0 %v384
        %430 = vmatprep.subr.mxu0 %v387
        %431 = vmatpush1.msra.mxu0 %v386
        %432 = vmatprep.subr.mxu0 %v389
        %433 = vmatpush1.msra.mxu0 %v388
        %434 = vmatprep.subr.mxu0 %v391
        %435 = vmatpush1.msra.mxu0 %v390
        %436 = vmatprep.subr.mxu0 %v393
        %437 = vmatpush1.msra.mxu0 %v392
        %438 = vmatprep.subr.mxu0 %v395
        %439 = vmatpush1.msra.mxu0 %v394
        %440 = vmatprep.subr.mxu0 %v397
        %441 = vmatpush1.msra.mxu0 %v396
        %442 = vmatprep.subr.mxu0 %v399
        %443 = vmatpush1.msra.mxu0 %v398
        %444 = vmatprep.subr.mxu0 %v401
        %445 = vmatpush1.msra.mxu0 %v400
        %446 = vmatprep.subr.mxu0 %v403
        %447 = vmatpush1.msra.mxu0 %v402
        %448 = vmatprep.subr.mxu0 %v405
        %449 = vmatpush1.msra.mxu0 %v404
        %450 = vmatprep.subr.mxu0 %v407
        %451 = vmatpush1.msra.mxu0 %v406
        %452 = vmatprep.subr.mxu0 0.0
        %453 = vmatpush1.msra.mxu0 0.0
        %454 = vmatprep.subr.mxu0 0.0
        %455 = vmatpush1.msra.mxu0 0.0
        %456 = vmatprep.subr.mxu0 0.0
        %457 = vmatpush1.msra.mxu0 0.0
        %458 = vmatprep.subr.mxu0 0.0
        %459 = vmatpush1.msra.mxu0 0.0
        %460 = vmatprep.subr.mxu0 0.0
        %461 = vmatpush1.msra.mxu0 0.0
        %462 = vmatprep.subr.mxu0 0.0
        %463 = vmatpush1.msra.mxu0 0.0
        %464 = vmatprep.subr.mxu0 0.0
        %465 = vmatpush1.msra.mxu0 0.0
        %466 = vmatprep.subr.mxu0 0.0
        %467 = vmatpush1.msra.mxu0 0.0
        %468 = vmatprep.subr.mxu0 0.0
        %469 = vmatpush1.msra.mxu0 0.0
        %470 = vmatprep.subr.mxu0 0.0
        %471 = vmatpush1.msra.mxu0 0.0
        %472 = vmatprep.subr.mxu0 0.0
        %473 = vmatpush1.msra.mxu0 0.0
        %474 = vmatprep.subr.mxu0 0.0
        %475 = vmatpush1.msra.mxu0 0.0
        %476 = vmatprep.subr.mxu0 0.0
        %477 = vmatpush1.msra.mxu0 0.0
        %478 = vmatprep.subr.mxu0 0.0
        %479 = vmatpush1.msra.mxu0 0.0
        %480 = vmatprep.subr.mxu0 0.0
        %481 = vmatpush1.msra.mxu0 0.0
        %482 = vmatprep.subr.mxu0 0.0
        %483 = vmatpush1.msra.mxu0 0.0
        %484 = vmatprep.mubr.f32.mxu0 0.0
        %485 = vmatmul.mubr.f32.gmra.mrb[0].mxu0 %v360
        %v486 = vpop.f32.mrb[0].mxu0
        %v487 = vadd.f32 %v413, %v486
        %v488 = vpop.f32.mrb[0].mxu0
        %v489 = vadd.f32 %v417, %v488
        %490 = vmatprep.mubr.f32.mxu0 0.0
        %491 = vmatmul.mubr.f32.gmra.mrb[0].mxu0 %v361
        %v492 = vpop.f32.mrb[0].mxu0
        %v493 = vadd.f32 %v413, %v492
        %v494 = vpop.f32.mrb[0].mxu0
        %v495 = vadd.f32 %v417, %v494
        %496 = vmatprep.mubr.f32.mxu0 0.0
        %497 = vmatmul.mubr.f32.gmra.mrb[0].mxu0 %v362
        %v498 = vpop.f32.mrb[0].mxu0
        %v499 = vadd.f32 %v413, %v498
        %v500 = vpop.f32.mrb[0].mxu0
        %v501 = vadd.f32 %v417, %v500
        %502 = vmatprep.mubr.f32.mxu0 0.0
        %503 = vmatmul.mubr.f32.gmra.mrb[0].mxu0 %v363
        %v504 = vpop.f32.mrb[0].mxu0
        %v505 = vadd.f32 %v413, %v504
        %v506 = vpop.f32.mrb[0].mxu0
        %v507 = vadd.f32 %v417, %v506
        %508 = vmatprep.mubr.f32.mxu0 0.0
        %509 = vmatmul.mubr.f32.gmra.mrb[0].mxu0 %v364
        %v510 = vpop.f32.mrb[0].mxu0
        %v511 = vadd.f32 %v413, %v510
        %v512 = vpop.f32.mrb[0].mxu0
        %v513 = vadd.f32 %v417, %v512
        %514 = vmatprep.mubr.f32.mxu0 0.0
        %515 = vmatmul.mubr.f32.gmra.mrb[0].mxu0 %v365
        %v516 = vpop.f32.mrb[0].mxu0
        %v517 = vadd.f32 %v413, %v516
        %v518 = vpop.f32.mrb[0].mxu0
        %v519 = vadd.f32 %v417, %v518
        %520 = vmatprep.mubr.f32.mxu0 0.0
        %521 = vmatmul.mubr.f32.gmra.mrb[0].mxu0 %v366
        %v522 = vpop.f32.mrb[0].mxu0
        %v523 = vadd.f32 %v413, %v522
        %v524 = vpop.f32.mrb[0].mxu0
        %v525 = vadd.f32 %v417, %v524
        %526 = vmatprep.mubr.f32.mxu0 0.0
        %527 = vmatmul.mubr.f32.gmra.mrb[0].mxu0 %v367
        %v528 = vpop.f32.mrb[0].mxu0
        %v529 = vadd.f32 %v413, %v528
        %v530 = vpop.f32.mrb[0].mxu0
        %v531 = vadd.f32 %v417, %v530
        %532 = vmatprep.mubr.f32.mxu0 0.0
        %533 = vmatmul.mubr.f32.gmra.mrb[0].mxu0 %v368
        %v534 = vpop.f32.mrb[0].mxu0
        %v535 = vadd.f32 %v413, %v534
        %v536 = vpop.f32.mrb[0].mxu0
        %v537 = vadd.f32 %v417, %v536
        %538 = vmatprep.mubr.f32.mxu0 0.0
        %539 = vmatmul.mubr.f32.gmra.mrb[0].mxu0 %v369
        %v540 = vpop.f32.mrb[0].mxu0
        %v541 = vadd.f32 %v413, %v540
        %v542 = vpop.f32.mrb[0].mxu0
        %v543 = vadd.f32 %v417, %v542
        %544 = vmatprep.mubr.f32.mxu0 0.0
        %545 = vmatmul.mubr.f32.gmra.mrb[0].mxu0 %v370
        %v546 = vpop.f32.mrb[0].mxu0
        %v547 = vadd.f32 %v413, %v546
        %v548 = vpop.f32.mrb[0].mxu0
        %v549 = vadd.f32 %v417, %v548
        %550 = vmatprep.mubr.f32.mxu0 0.0
        %551 = vmatmul.mubr.f32.gmra.mrb[0].mxu0 %v371
        %v552 = vpop.f32.mrb[0].mxu0
        %v553 = vadd.f32 %v413, %v552
        %v554 = vpop.f32.mrb[0].mxu0
        %v555 = vadd.f32 %v417, %v554
        %556 = vmatprep.mubr.f32.mxu0 0.0
        %557 = vmatmul.mubr.f32.gmra.mrb[0].mxu0 %v372
        %v558 = vpop.f32.mrb[0].mxu0
        %v559 = vadd.f32 %v413, %v558
        %v560 = vpop.f32.mrb[0].mxu0
        %v561 = vadd.f32 %v417, %v560
        %562 = vmatprep.mubr.f32.mxu0 0.0
        %563 = vmatmul.mubr.f32.gmra.mrb[0].mxu0 %v373
        %v564 = vpop.f32.mrb[0].mxu0
        %v565 = vadd.f32 %v413, %v564
        %v566 = vpop.f32.mrb[0].mxu0
        %v567 = vadd.f32 %v417, %v566
        %568 = vmatprep.mubr.f32.mxu0 0.0
        %569 = vmatmul.mubr.f32.gmra.mrb[0].mxu0 %v374
        %v570 = vpop.f32.mrb[0].mxu0
        %v571 = vadd.f32 %v413, %v570
        %v572 = vpop.f32.mrb[0].mxu0
        %v573 = vadd.f32 %v417, %v572
        %574 = vmatprep.mubr.f32.mxu0 0.0
        %575 = vmatmul.mubr.f32.gmra.mrb[0].mxu0 %v375
        %v576 = vpop.f32.mrb[0].mxu0
        %v577 = vadd.f32 %v413, %v576
        %v578 = vpop.f32.mrb[0].mxu0
        %v579 = vadd.f32 %v417, %v578
        %580 = vdwg.mxu0
        %v581 = vmax.f32 %v487, 0.0
        %v582 = vmax.f32 %v489, 0.0
        %v583 = vmax.f32 %v493, 0.0
        %v584 = vmax.f32 %v495, 0.0
        %v585 = vmax.f32 %v499, 0.0
        %v586 = vmax.f32 %v501, 0.0
        %v587 = vmax.f32 %v505, 0.0
        %v588 = vmax.f32 %v507, 0.0
        %v589 = vmax.f32 %v511, 0.0
        %v590 = vmax.f32 %v513, 0.0
        %v591 = vmax.f32 %v517, 0.0
        %v592 = vmax.f32 %v519, 0.0
        %v593 = vmax.f32 %v523, 0.0
        %v594 = vmax.f32 %v525, 0.0
        %v595 = vmax.f32 %v529, 0.0
        %v596 = vmax.f32 %v531, 0.0
        %v597 = vmax.f32 %v535, 0.0
        %v598 = vmax.f32 %v537, 0.0
        %v599 = vmax.f32 %v541, 0.0
        %v600 = vmax.f32 %v543, 0.0
        %v601 = vmax.f32 %v547, 0.0
        %v602 = vmax.f32 %v549, 0.0
        %v603 = vmax.f32 %v553, 0.0
        %v604 = vmax.f32 %v555, 0.0
        %v605 = vmax.f32 %v559, 0.0
        %v606 = vmax.f32 %v561, 0.0
        %v607 = vmax.f32 %v565, 0.0
        %v608 = vmax.f32 %v567, 0.0
        %v609 = vmax.f32 %v571, 0.0
        %v610 = vmax.f32 %v573, 0.0
        %v611 = vmax.f32 %v577, 0.0
        %v612 = vmax.f32 %v579, 0.0
        %v613 = vld [vmem:[#allocation2] sm:$0xff]
        %v614 = vld [vmem:[#allocation2 + $0x8] sm:$0xff]
        %v615 = vld [vmem:[#allocation2 + $0x10] sm:$0xff]
        %v616 = vld [vmem:[#allocation2 + $0x18] sm:$0xff]
        %v617 = vld [vmem:[#allocation2 + $0x20] sm:$0xff]
        %v618 = vld [vmem:[#allocation2 + $0x28] sm:$0xff]
        %v619 = vld [vmem:[#allocation2 + $0x30] sm:$0xff]
        %v620 = vld [vmem:[#allocation2 + $0x38] sm:$0xff]
        %v621 = vld [vmem:[#allocation2 + $0x40] sm:$0xff]
        %v622 = vld [vmem:[#allocation2 + $0x48] sm:$0xff]
        %v623 = vld [vmem:[#allocation2 + $0x50] sm:$0xff]
        %v624 = vld [vmem:[#allocation2 + $0x58] sm:$0xff]
        %v625 = vld [vmem:[#allocation2 + $0x60] sm:$0xff]
        %v626 = vld [vmem:[#allocation2 + $0x68] sm:$0xff]
        %v627 = vld [vmem:[#allocation2 + $0x70] sm:$0xff]
        %v628 = vld [vmem:[#allocation2 + $0x78] sm:$0xff]
        %v629 = vld [vmem:[#allocation8] sm:$0xff]
        %v630 = vld [vmem:[#allocation8 + $0x8] sm:$0xff]
        %v631 = vld [vmem:[#allocation8 + $0x10] sm:$0xff]
        %v632 = vld [vmem:[#allocation8 + $0x18] sm:$0xff]
        %v633 = vld [vmem:[#allocation8 + $0x20] sm:$0xff]
        %v634 = vld [vmem:[#allocation8 + $0x28] sm:$0xff]
        %v635 = vld [vmem:[#allocation8 + $0x30] sm:$0xff]
        %v636 = vld [vmem:[#allocation8 + $0x38] sm:$0xff]
        %v637 = vld [vmem:[#allocation8 + $0x40] sm:$0xff]
        %v638 = vld [vmem:[#allocation8 + $0x48] sm:$0xff]
        %v639 = vld [vmem:[#allocation8 + $0x50] sm:$0xff]
        %v640 = vld [vmem:[#allocation8 + $0x58] sm:$0xff]
        %v641 = vld [vmem:[#allocation8 + $0x60] sm:$0xff]
        %v642 = vld [vmem:[#allocation8 + $0x68] sm:$0xff]
        %v643 = vld [vmem:[#allocation8 + $0x70] sm:$0xff]
        %v644 = vld [vmem:[#allocation8 + $0x78] sm:$0xff]
        %v645 = vld [vmem:[#allocation8 + $0x80] sm:$0xff]
        %v646 = vld [vmem:[#allocation8 + $0x88] sm:$0xff]
        %v647 = vld [vmem:[#allocation8 + $0x90] sm:$0xff]
        %v648 = vld [vmem:[#allocation8 + $0x98] sm:$0xff]
        %v649 = vld [vmem:[#allocation8 + $0xa0] sm:$0xff]
        %v650 = vld [vmem:[#allocation8 + $0xa8] sm:$0xff]
        %v651 = vld [vmem:[#allocation8 + $0xb0] sm:$0xff]
        %v652 = vld [vmem:[#allocation8 + $0xb8] sm:$0xff]
        %v653 = vld [vmem:[#allocation8 + $0xc0] sm:$0xff]
        %v654 = vld [vmem:[#allocation8 + $0xc8] sm:$0xff]
        %v655 = vld [vmem:[#allocation8 + $0xd0] sm:$0xff]
        %v656 = vld [vmem:[#allocation8 + $0xd8] sm:$0xff]
        %v657 = vld [vmem:[#allocation8 + $0xe0] sm:$0xff]
        %v658 = vld [vmem:[#allocation8 + $0xe8] sm:$0xff]
        %v659 = vld [vmem:[#allocation8 + $0xf0] sm:$0xff]
        %v660 = vld [vmem:[#allocation8 + $0xf8] sm:$0xff]
        %661 = vmatprep.subr.mxu0 0.0
        %662 = vmatpush1.msra.mxu0 %v629
        %663 = vmatprep.subr.mxu0 0.0
        %664 = vmatpush1.msra.mxu0 %v630
        %665 = vmatprep.subr.mxu0 0.0
        %666 = vmatpush1.msra.mxu0 %v631
        %667 = vmatprep.subr.mxu0 0.0
        %668 = vmatpush1.msra.mxu0 %v632
        %669 = vmatprep.subr.mxu0 0.0
        %670 = vmatpush1.msra.mxu0 %v633
        %671 = vmatprep.subr.mxu0 0.0
        %672 = vmatpush1.msra.mxu0 %v634
        %673 = vmatprep.subr.mxu0 0.0
        %674 = vmatpush1.msra.mxu0 %v635
        %675 = vmatprep.subr.mxu0 0.0
        %676 = vmatpush1.msra.mxu0 %v636
        %677 = vmatprep.subr.mxu0 0.0
        %678 = vmatpush1.msra.mxu0 %v637
        %679 = vmatprep.subr.mxu0 0.0
        %680 = vmatpush1.msra.mxu0 %v638
        %681 = vmatprep.subr.mxu0 0.0
        %682 = vmatpush1.msra.mxu0 %v639
        %683 = vmatprep.subr.mxu0 0.0
        %684 = vmatpush1.msra.mxu0 %v640
        %685 = vmatprep.subr.mxu0 0.0
        %686 = vmatpush1.msra.mxu0 %v641
        %687 = vmatprep.subr.mxu0 0.0
        %688 = vmatpush1.msra.mxu0 %v642
        %689 = vmatprep.subr.mxu0 0.0
        %690 = vmatpush1.msra.mxu0 %v643
        %691 = vmatprep.subr.mxu0 0.0
        %692 = vmatpush1.msra.mxu0 %v644
        %693 = vmatprep.subr.mxu0 0.0
        %694 = vmatpush1.msra.mxu0 %v645
        %695 = vmatprep.subr.mxu0 0.0
        %696 = vmatpush1.msra.mxu0 %v646
        %697 = vmatprep.subr.mxu0 0.0
        %698 = vmatpush1.msra.mxu0 %v647
        %699 = vmatprep.subr.mxu0 0.0
        %700 = vmatpush1.msra.mxu0 %v648
        %701 = vmatprep.subr.mxu0 0.0
        %702 = vmatpush1.msra.mxu0 %v649
        %703 = vmatprep.subr.mxu0 0.0
        %704 = vmatpush1.msra.mxu0 %v650
        %705 = vmatprep.subr.mxu0 0.0
        %706 = vmatpush1.msra.mxu0 %v651
        %707 = vmatprep.subr.mxu0 0.0
        %708 = vmatpush1.msra.mxu0 %v652
        %709 = vmatprep.subr.mxu0 0.0
        %710 = vmatpush1.msra.mxu0 %v653
        %711 = vmatprep.subr.mxu0 0.0
        %712 = vmatpush1.msra.mxu0 %v654
        %713 = vmatprep.subr.mxu0 0.0
        %714 = vmatpush1.msra.mxu0 %v655
        %715 = vmatprep.subr.mxu0 0.0
        %716 = vmatpush1.msra.mxu0 %v656
        %717 = vmatprep.subr.mxu0 0.0
        %718 = vmatpush1.msra.mxu0 %v657
        %719 = vmatprep.subr.mxu0 0.0
        %720 = vmatpush1.msra.mxu0 %v658
        %721 = vmatprep.subr.mxu0 0.0
        %722 = vmatpush1.msra.mxu0 %v659
        %723 = vmatprep.subr.mxu0 0.0
        %724 = vmatpush1.msra.mxu0 %v660
        %725 = vmatprep.mubr.f32.mxu0 %v582
        %726 = vmatmul.mubr.f32.gmra.mrb[0].mxu0 %v581
        %v727 = vpop.f32.mrb[0].mxu0
        %v728 = vadd.f32 0.0, %v727
        %v729 = vpop.f32.mrb[0].mxu0
        %730 = vmatprep.mubr.f32.mxu0 %v584
        %731 = vmatmul.mubr.f32.gmra.mrb[0].mxu0 %v583
        %v732 = vpop.f32.mrb[0].mxu0
        %v733 = vadd.f32 0.0, %v732
        %v734 = vpop.f32.mrb[0].mxu0
        %735 = vmatprep.mubr.f32.mxu0 %v586
        %736 = vmatmul.mubr.f32.gmra.mrb[0].mxu0 %v585
        %v737 = vpop.f32.mrb[0].mxu0
        %v738 = vadd.f32 0.0, %v737
        %v739 = vpop.f32.mrb[0].mxu0
        %740 = vmatprep.mubr.f32.mxu0 %v588
        %741 = vmatmul.mubr.f32.gmra.mrb[0].mxu0 %v587
        %v742 = vpop.f32.mrb[0].mxu0
        %v743 = vadd.f32 0.0, %v742
        %v744 = vpop.f32.mrb[0].mxu0
        %745 = vmatprep.mubr.f32.mxu0 %v590
        %746 = vmatmul.mubr.f32.gmra.mrb[0].mxu0 %v589
        %v747 = vpop.f32.mrb[0].mxu0
        %v748 = vadd.f32 0.0, %v747
        %v749 = vpop.f32.mrb[0].mxu0
        %750 = vmatprep.mubr.f32.mxu0 %v592
        %751 = vmatmul.mubr.f32.gmra.mrb[0].mxu0 %v591
        %v752 = vpop.f32.mrb[0].mxu0
        %v753 = vadd.f32 0.0, %v752
        %v754 = vpop.f32.mrb[0].mxu0
        %755 = vmatprep.mubr.f32.mxu0 %v594
        %756 = vmatmul.mubr.f32.gmra.mrb[0].mxu0 %v593
        %v757 = vpop.f32.mrb[0].mxu0
        %v758 = vadd.f32 0.0, %v757
        %v759 = vpop.f32.mrb[0].mxu0
        %760 = vmatprep.mubr.f32.mxu0 %v596
        %761 = vmatmul.mubr.f32.gmra.mrb[0].mxu0 %v595
        %v762 = vpop.f32.mrb[0].mxu0
        %v763 = vadd.f32 0.0, %v762
        %v764 = vpop.f32.mrb[0].mxu0
        %765 = vmatprep.mubr.f32.mxu0 %v598
        %766 = vmatmul.mubr.f32.gmra.mrb[0].mxu0 %v597
        %v767 = vpop.f32.mrb[0].mxu0
        %v768 = vadd.f32 0.0, %v767
        %v769 = vpop.f32.mrb[0].mxu0
        %770 = vmatprep.mubr.f32.mxu0 %v600
        %771 = vmatmul.mubr.f32.gmra.mrb[0].mxu0 %v599
        %v772 = vpop.f32.mrb[0].mxu0
        %v773 = vadd.f32 0.0, %v772
        %v774 = vpop.f32.mrb[0].mxu0
        %775 = vmatprep.mubr.f32.mxu0 %v602
        %776 = vmatmul.mubr.f32.gmra.mrb[0].mxu0 %v601
        %v777 = vpop.f32.mrb[0].mxu0
        %v778 = vadd.f32 0.0, %v777
        %v779 = vpop.f32.mrb[0].mxu0
        %780 = vmatprep.mubr.f32.mxu0 %v604
        %781 = vmatmul.mubr.f32.gmra.mrb[0].mxu0 %v603
        %v782 = vpop.f32.mrb[0].mxu0
        %v783 = vadd.f32 0.0, %v782
        %v784 = vpop.f32.mrb[0].mxu0
        %785 = vmatprep.mubr.f32.mxu0 %v606
        %786 = vmatmul.mubr.f32.gmra.mrb[0].mxu0 %v605
        %v787 = vpop.f32.mrb[0].mxu0
        %v788 = vadd.f32 0.0, %v787
        %v789 = vpop.f32.mrb[0].mxu0
        %790 = vmatprep.mubr.f32.mxu0 %v608
        %791 = vmatmul.mubr.f32.gmra.mrb[0].mxu0 %v607
        %v792 = vpop.f32.mrb[0].mxu0
        %v793 = vadd.f32 0.0, %v792
        %v794 = vpop.f32.mrb[0].mxu0
        %795 = vmatprep.mubr.f32.mxu0 %v610
        %796 = vmatmul.mubr.f32.gmra.mrb[0].mxu0 %v609
        %v797 = vpop.f32.mrb[0].mxu0
        %v798 = vadd.f32 0.0, %v797
        %v799 = vpop.f32.mrb[0].mxu0
        %800 = vmatprep.mubr.f32.mxu0 %v612
        %801 = vmatmul.mubr.f32.gmra.mrb[0].mxu0 %v611
        %v802 = vpop.f32.mrb[0].mxu0
        %v803 = vadd.f32 0.0, %v802
        %v804 = vpop.f32.mrb[0].mxu0
        %805 = vdwg.mxu0
        %v806 = vadd.f32 %v613, %v728
        %v807 = vadd.f32 %v614, %v733
        %v808 = vadd.f32 %v615, %v738
        %v809 = vadd.f32 %v616, %v743
        %v810 = vadd.f32 %v617, %v748
        %v811 = vadd.f32 %v618, %v753
        %v812 = vadd.f32 %v619, %v758
        %v813 = vadd.f32 %v620, %v763
        %v814 = vadd.f32 %v621, %v768
        %v815 = vadd.f32 %v622, %v773
        %v816 = vadd.f32 %v623, %v778
        %v817 = vadd.f32 %v624, %v783
        %v818 = vadd.f32 %v625, %v788
        %v819 = vadd.f32 %v626, %v793
        %v820 = vadd.f32 %v627, %v798
        %v821 = vadd.f32 %v628, %v803
        %822 = vst [vmem:[#allocation2] sm:$0xff] %v806
        %823 = vst [vmem:[#allocation2 + $0x8] sm:$0xff] %v807
        %824 = vst [vmem:[#allocation2 + $0x10] sm:$0xff] %v808
        %825 = vst [vmem:[#allocation2 + $0x18] sm:$0xff] %v809
        %826 = vst [vmem:[#allocation2 + $0x20] sm:$0xff] %v810
        %827 = vst [vmem:[#allocation2 + $0x28] sm:$0xff] %v811
        %828 = vst [vmem:[#allocation2 + $0x30] sm:$0xff] %v812
        %829 = vst [vmem:[#allocation2 + $0x38] sm:$0xff] %v813
        %830 = vst [vmem:[#allocation2 + $0x40] sm:$0xff] %v814
        %831 = vst [vmem:[#allocation2 + $0x48] sm:$0xff] %v815
        %832 = vst [vmem:[#allocation2 + $0x50] sm:$0xff] %v816
        %833 = vst [vmem:[#allocation2 + $0x58] sm:$0xff] %v817
        %834 = vst [vmem:[#allocation2 + $0x60] sm:$0xff] %v818
        %835 = vst [vmem:[#allocation2 + $0x68] sm:$0xff] %v819
        %836 = vst [vmem:[#allocation2 + $0x70] sm:$0xff] %v820
        %837 = vst [vmem:[#allocation2 + $0x78] sm:$0xff] %v821
        // Predicated region
        $region65: #{tpu_custom_call.1} parent=47 // pred_check
          %p838 = pneg %p340
        $region66: #{tpu_custom_call.1} parent=47 // pred_check_branch
          %840 = sbr.rel (%p838) target = $region68
        $region67: #{tpu_custom_call.1} parent=47 // pred_region
          %v841 = vld [vmem:[#allocation2] sm:$0xff]
          %v842 = vld [vmem:[#allocation2 + $0x8] sm:$0xff]
          %v843 = vld [vmem:[#allocation2 + $0x10] sm:$0xff]
          %v844 = vld [vmem:[#allocation2 + $0x18] sm:$0xff]
          %v845 = vld [vmem:[#allocation2 + $0x20] sm:$0xff]
          %v846 = vld [vmem:[#allocation2 + $0x28] sm:$0xff]
          %v847 = vld [vmem:[#allocation2 + $0x30] sm:$0xff]
          %v848 = vld [vmem:[#allocation2 + $0x38] sm:$0xff]
          %v849 = vld [vmem:[#allocation2 + $0x40] sm:$0xff]
          %v850 = vld [vmem:[#allocation2 + $0x48] sm:$0xff]
          %v851 = vld [vmem:[#allocation2 + $0x50] sm:$0xff]
          %v852 = vld [vmem:[#allocation2 + $0x58] sm:$0xff]
          %v853 = vld [vmem:[#allocation2 + $0x60] sm:$0xff]
          %v854 = vld [vmem:[#allocation2 + $0x68] sm:$0xff]
          %v855 = vld [vmem:[#allocation2 + $0x70] sm:$0xff]
          %v856 = vld [vmem:[#allocation2 + $0x78] sm:$0xff]
          %v857 = vadd.f32 %v360, %v841
          %v858 = vadd.f32 %v361, %v842
          %v859 = vadd.f32 %v362, %v843
          %v860 = vadd.f32 %v363, %v844
          %v861 = vadd.f32 %v364, %v845
          %v862 = vadd.f32 %v365, %v846
          %v863 = vadd.f32 %v366, %v847
          %v864 = vadd.f32 %v367, %v848
          %v865 = vadd.f32 %v368, %v849
          %v866 = vadd.f32 %v369, %v850
          %v867 = vadd.f32 %v370, %v851
          %v868 = vadd.f32 %v371, %v852
          %v869 = vadd.f32 %v372, %v853
          %v870 = vadd.f32 %v373, %v854
          %v871 = vadd.f32 %v374, %v855
          %v872 = vadd.f32 %v375, %v856
          %v873 = vld [vmem:[%s4] sm:$0x1]
          %v875 = vlaneseq
          %v876 = vshrl.u32 %v875, 7
          %v877 = vsub.s32 0, %v876
          %v878 = vrot.slane %v873, %v877
          %v880 = vadd.f32 %v857, %v878
          %v881 = vadd.f32 %v858, %v878
          %v882 = vadd.f32 %v859, %v878
          %v883 = vadd.f32 %v860, %v878
          %v884 = vadd.f32 %v861, %v878
          %v885 = vadd.f32 %v862, %v878
          %v886 = vadd.f32 %v863, %v878
          %v887 = vadd.f32 %v864, %v878
          %v888 = vadd.f32 %v865, %v878
          %v889 = vadd.f32 %v866, %v878
          %v890 = vadd.f32 %v867, %v878
          %v891 = vadd.f32 %v868, %v878
          %v892 = vadd.f32 %v869, %v878
          %v893 = vadd.f32 %v870, %v878
          %v894 = vadd.f32 %v871, %v878
          %v895 = vadd.f32 %v872, %v878
          %896 = vadd.xlane.f32.xlu0 %v880
          %v897 = vpop.xlane.xlu0 %896
          %898 = vadd.xlane.f32.xlu0 %v881
          %v899 = vpop.xlane.xlu0 %898
          %900 = vadd.xlane.f32.xlu0 %v882
          %v901 = vpop.xlane.xlu0 %900
          %902 = vadd.xlane.f32.xlu0 %v883
          %v903 = vpop.xlane.xlu0 %902
          %904 = vadd.xlane.f32.xlu0 %v884
          %v905 = vpop.xlane.xlu0 %904
          %906 = vadd.xlane.f32.xlu0 %v885
          %v907 = vpop.xlane.xlu0 %906
          %908 = vadd.xlane.f32.xlu0 %v886
          %v909 = vpop.xlane.xlu0 %908
          %910 = vadd.xlane.f32.xlu0 %v887
          %v911 = vpop.xlane.xlu0 %910
          %912 = vadd.xlane.f32.xlu0 %v888
          %v913 = vpop.xlane.xlu0 %912
          %914 = vadd.xlane.f32.xlu0 %v889
          %v915 = vpop.xlane.xlu0 %914
          %916 = vadd.xlane.f32.xlu0 %v890
          %v917 = vpop.xlane.xlu0 %916
          %918 = vadd.xlane.f32.xlu0 %v891
          %v919 = vpop.xlane.xlu0 %918
          %920 = vadd.xlane.f32.xlu0 %v892
          %v921 = vpop.xlane.xlu0 %920
          %922 = vadd.xlane.f32.xlu0 %v893
          %v923 = vpop.xlane.xlu0 %922
          %924 = vadd.xlane.f32.xlu0 %v894
          %v925 = vpop.xlane.xlu0 %924
          %926 = vadd.xlane.f32.xlu0 %v895
          %v927 = vpop.xlane.xlu0 %926
          %v928 = vmul.f32 %v897, 0.0078125
          %v929 = vmul.f32 %v899, 0.0078125
          %v930 = vmul.f32 %v901, 0.0078125
          %v931 = vmul.f32 %v903, 0.0078125
          %v932 = vmul.f32 %v905, 0.0078125
          %v933 = vmul.f32 %v907, 0.0078125
          %v934 = vmul.f32 %v909, 0.0078125
          %v935 = vmul.f32 %v911, 0.0078125
          %v936 = vmul.f32 %v913, 0.0078125
          %v937 = vmul.f32 %v915, 0.0078125
          %v938 = vmul.f32 %v917, 0.0078125
          %v939 = vmul.f32 %v919, 0.0078125
          %v940 = vmul.f32 %v921, 0.0078125
          %v941 = vmul.f32 %v923, 0.0078125
          %v942 = vmul.f32 %v925, 0.0078125
          %v943 = vmul.f32 %v927, 0.0078125
          %v944 = vmul.f32 %v880, %v880
          %v945 = vmul.f32 %v881, %v881
          %v946 = vmul.f32 %v882, %v882
          %v947 = vmul.f32 %v883, %v883
          %v948 = vmul.f32 %v884, %v884
          %v949 = vmul.f32 %v885, %v885
          %v950 = vmul.f32 %v886, %v886
          %v951 = vmul.f32 %v887, %v887
          %v952 = vmul.f32 %v888, %v888
          %v953 = vmul.f32 %v889, %v889
          %v954 = vmul.f32 %v890, %v890
          %v955 = vmul.f32 %v891, %v891
          %v956 = vmul.f32 %v892, %v892
          %v957 = vmul.f32 %v893, %v893
          %v958 = vmul.f32 %v894, %v894
          %v959 = vmul.f32 %v895, %v895
          %960 = vadd.xlane.f32.xlu0 %v944
          %v961 = vpop.xlane.xlu0 %960
          %962 = vadd.xlane.f32.xlu0 %v945
          %v963 = vpop.xlane.xlu0 %962
          %964 = vadd.xlane.f32.xlu0 %v946
          %v965 = vpop.xlane.xlu0 %964
          %966 = vadd.xlane.f32.xlu0 %v947
          %v967 = vpop.xlane.xlu0 %966
          %968 = vadd.xlane.f32.xlu0 %v948
          %v969 = vpop.xlane.xlu0 %968
          %970 = vadd.xlane.f32.xlu0 %v949
          %v971 = vpop.xlane.xlu0 %970
          %972 = vadd.xlane.f32.xlu0 %v950
          %v973 = vpop.xlane.xlu0 %972
          %974 = vadd.xlane.f32.xlu0 %v951
          %v975 = vpop.xlane.xlu0 %974
          %976 = vadd.xlane.f32.xlu0 %v952
          %v977 = vpop.xlane.xlu0 %976
          %978 = vadd.xlane.f32.xlu0 %v953
          %v979 = vpop.xlane.xlu0 %978
          %980 = vadd.xlane.f32.xlu0 %v954
          %v981 = vpop.xlane.xlu0 %980
          %982 = vadd.xlane.f32.xlu0 %v955
          %v983 = vpop.xlane.xlu0 %982
          %984 = vadd.xlane.f32.xlu0 %v956
          %v985 = vpop.xlane.xlu0 %984
          %986 = vadd.xlane.f32.xlu0 %v957
          %v987 = vpop.xlane.xlu0 %986
          %988 = vadd.xlane.f32.xlu0 %v958
          %v989 = vpop.xlane.xlu0 %988
          %990 = vadd.xlane.f32.xlu0 %v959
          %v991 = vpop.xlane.xlu0 %990
          %v992 = vmul.f32 %v961, 0.0078125
          %v993 = vmul.f32 %v963, 0.0078125
          %v994 = vmul.f32 %v965, 0.0078125
          %v995 = vmul.f32 %v967, 0.0078125
          %v996 = vmul.f32 %v969, 0.0078125
          %v997 = vmul.f32 %v971, 0.0078125
          %v998 = vmul.f32 %v973, 0.0078125
          %v999 = vmul.f32 %v975, 0.0078125
          %v1000 = vmul.f32 %v977, 0.0078125
          %v1001 = vmul.f32 %v979, 0.0078125
          %v1002 = vmul.f32 %v981, 0.0078125
          %v1003 = vmul.f32 %v983, 0.0078125
          %v1004 = vmul.f32 %v985, 0.0078125
          %v1005 = vmul.f32 %v987, 0.0078125
          %v1006 = vmul.f32 %v989, 0.0078125
          %v1007 = vmul.f32 %v991, 0.0078125
          %v1008 = vmul.f32 %v928, %v928
          %v1009 = vmul.f32 %v929, %v929
          %v1010 = vmul.f32 %v930, %v930
          %v1011 = vmul.f32 %v931, %v931
          %v1012 = vmul.f32 %v932, %v932
          %v1013 = vmul.f32 %v933, %v933
          %v1014 = vmul.f32 %v934, %v934
          %v1015 = vmul.f32 %v935, %v935
          %v1016 = vmul.f32 %v936, %v936
          %v1017 = vmul.f32 %v937, %v937
          %v1018 = vmul.f32 %v938, %v938
          %v1019 = vmul.f32 %v939, %v939
          %v1020 = vmul.f32 %v940, %v940
          %v1021 = vmul.f32 %v941, %v941
          %v1022 = vmul.f32 %v942, %v942
          %v1023 = vmul.f32 %v943, %v943
          %v1024 = vsub.f32 %v992, %v1008
          %v1025 = vsub.f32 %v993, %v1009
          %v1026 = vsub.f32 %v994, %v1010
          %v1027 = vsub.f32 %v995, %v1011
          %v1028 = vsub.f32 %v996, %v1012
          %v1029 = vsub.f32 %v997, %v1013
          %v1030 = vsub.f32 %v998, %v1014
          %v1031 = vsub.f32 %v999, %v1015
          %v1032 = vsub.f32 %v1000, %v1016
          %v1033 = vsub.f32 %v1001, %v1017
          %v1034 = vsub.f32 %v1002, %v1018
          %v1035 = vsub.f32 %v1003, %v1019
          %v1036 = vsub.f32 %v1004, %v1020
          %v1037 = vsub.f32 %v1005, %v1021
          %v1038 = vsub.f32 %v1006, %v1022
          %v1039 = vsub.f32 %v1007, %v1023
          %v1040 = vsub.f32 %v880, %v928
          %v1041 = vsub.f32 %v881, %v929
          %v1042 = vsub.f32 %v882, %v930
          %v1043 = vsub.f32 %v883, %v931
          %v1044 = vsub.f32 %v884, %v932
          %v1045 = vsub.f32 %v885, %v933
          %v1046 = vsub.f32 %v886, %v934
          %v1047 = vsub.f32 %v887, %v935
          %v1048 = vsub.f32 %v888, %v936
          %v1049 = vsub.f32 %v889, %v937
          %v1050 = vsub.f32 %v890, %v938
          %v1051 = vsub.f32 %v891, %v939
          %v1052 = vsub.f32 %v892, %v940
          %v1053 = vsub.f32 %v893, %v941
          %v1054 = vsub.f32 %v894, %v942
          %v1055 = vsub.f32 %v895, %v943
          %v1056 = vadd.f32 %v1024, 1e-05
          %v1057 = vadd.f32 %v1025, 1e-05
          %v1058 = vadd.f32 %v1026, 1e-05
          %v1059 = vadd.f32 %v1027, 1e-05
          %v1060 = vadd.f32 %v1028, 1e-05
          %v1061 = vadd.f32 %v1029, 1e-05
          %v1062 = vadd.f32 %v1030, 1e-05
          %v1063 = vadd.f32 %v1031, 1e-05
          %v1064 = vadd.f32 %v1032, 1e-05
          %v1065 = vadd.f32 %v1033, 1e-05
          %v1066 = vadd.f32 %v1034, 1e-05
          %v1067 = vadd.f32 %v1035, 1e-05
          %v1068 = vadd.f32 %v1036, 1e-05
          %v1069 = vadd.f32 %v1037, 1e-05
          %v1070 = vadd.f32 %v1038, 1e-05
          %v1071 = vadd.f32 %v1039, 1e-05
          %v1072 = vrsqrt.pop %v1056
          %v1073 = vrsqrt.pop %v1057
          %v1074 = vrsqrt.pop %v1058
          %v1075 = vrsqrt.pop %v1059
          %v1076 = vrsqrt.pop %v1060
          %v1077 = vrsqrt.pop %v1061
          %v1078 = vrsqrt.pop %v1062
          %v1079 = vrsqrt.pop %v1063
          %v1080 = vrsqrt.pop %v1064
          %v1081 = vrsqrt.pop %v1065
          %v1082 = vrsqrt.pop %v1066
          %v1083 = vrsqrt.pop %v1067
          %v1084 = vrsqrt.pop %v1068
          %v1085 = vrsqrt.pop %v1069
          %v1086 = vrsqrt.pop %v1070
          %v1087 = vrsqrt.pop %v1071
          %v1088 = vmul.f32 %v1040, %v1072
          %v1089 = vmul.f32 %v1041, %v1073
          %v1090 = vmul.f32 %v1042, %v1074
          %v1091 = vmul.f32 %v1043, %v1075
          %v1092 = vmul.f32 %v1044, %v1076
          %v1093 = vmul.f32 %v1045, %v1077
          %v1094 = vmul.f32 %v1046, %v1078
          %v1095 = vmul.f32 %v1047, %v1079
          %v1096 = vmul.f32 %v1048, %v1080
          %v1097 = vmul.f32 %v1049, %v1081
          %v1098 = vmul.f32 %v1050, %v1082
          %v1099 = vmul.f32 %v1051, %v1083
          %v1100 = vmul.f32 %v1052, %v1084
          %v1101 = vmul.f32 %v1053, %v1085
          %v1102 = vmul.f32 %v1054, %v1086
          %v1103 = vmul.f32 %v1055, %v1087
          %v1104 = vld [vmem:[%s5] sm:$0x1]
          %v1106 = vlaneseq
          %v1107 = vshrl.u32 %v1106, 7
          %v1108 = vsub.s32 0, %v1107
          %v1109 = vrot.slane %v1104, %v1108
          %v1111 = vmul.f32 %v1088, %v1109
          %v1112 = vmul.f32 %v1089, %v1109
          %v1113 = vmul.f32 %v1090, %v1109
          %v1114 = vmul.f32 %v1091, %v1109
          %v1115 = vmul.f32 %v1092, %v1109
          %v1116 = vmul.f32 %v1093, %v1109
          %v1117 = vmul.f32 %v1094, %v1109
          %v1118 = vmul.f32 %v1095, %v1109
          %v1119 = vmul.f32 %v1096, %v1109
          %v1120 = vmul.f32 %v1097, %v1109
          %v1121 = vmul.f32 %v1098, %v1109
          %v1122 = vmul.f32 %v1099, %v1109
          %v1123 = vmul.f32 %v1100, %v1109
          %v1124 = vmul.f32 %v1101, %v1109
          %v1125 = vmul.f32 %v1102, %v1109
          %v1126 = vmul.f32 %v1103, %v1109
          %v1127 = vld [vmem:[%s6] sm:$0x1]
          %v1129 = vlaneseq
          %v1130 = vshrl.u32 %v1129, 7
          %v1131 = vsub.s32 0, %v1130
          %v1132 = vrot.slane %v1127, %v1131
          %v1134 = vadd.f32 %v1111, %v1132
          %v1135 = vadd.f32 %v1112, %v1132
          %v1136 = vadd.f32 %v1113, %v1132
          %v1137 = vadd.f32 %v1114, %v1132
          %v1138 = vadd.f32 %v1115, %v1132
          %v1139 = vadd.f32 %v1116, %v1132
          %v1140 = vadd.f32 %v1117, %v1132
          %v1141 = vadd.f32 %v1118, %v1132
          %v1142 = vadd.f32 %v1119, %v1132
          %v1143 = vadd.f32 %v1120, %v1132
          %v1144 = vadd.f32 %v1121, %v1132
          %v1145 = vadd.f32 %v1122, %v1132
          %v1146 = vadd.f32 %v1123, %v1132
          %v1147 = vadd.f32 %v1124, %v1132
          %v1148 = vadd.f32 %v1125, %v1132
          %v1149 = vadd.f32 %v1126, %v1132
          %1150 = vst [vmem:[%s337] sm:$0xff] %v1134
          %1151 = vst [vmem:[%s337 + $0x8] sm:$0xff] %v1135
          %1152 = vst [vmem:[%s337 + $0x10] sm:$0xff] %v1136
          %1153 = vst [vmem:[%s337 + $0x18] sm:$0xff] %v1137
          %1154 = vst [vmem:[%s337 + $0x20] sm:$0xff] %v1138
          %1155 = vst [vmem:[%s337 + $0x28] sm:$0xff] %v1139
          %1156 = vst [vmem:[%s337 + $0x30] sm:$0xff] %v1140
          %1157 = vst [vmem:[%s337 + $0x38] sm:$0xff] %v1141
          %1158 = vst [vmem:[%s337 + $0x40] sm:$0xff] %v1142
          %1159 = vst [vmem:[%s337 + $0x48] sm:$0xff] %v1143
          %1160 = vst [vmem:[%s337 + $0x50] sm:$0xff] %v1144
          %1161 = vst [vmem:[%s337 + $0x58] sm:$0xff] %v1145
          %1162 = vst [vmem:[%s337 + $0x60] sm:$0xff] %v1146
          %1163 = vst [vmem:[%s337 + $0x68] sm:$0xff] %v1147
          %1164 = vst [vmem:[%s337 + $0x70] sm:$0xff] %v1148
          %1165 = vst [vmem:[%s337 + $0x78] sm:$0xff] %v1149
        $region68: #{tpu_custom_call.1} parent=47 // pred_fallthru
          _
        %s1166 = sand.u32 %s197, 1
        %s1167 = scalar_lea.sflag [#allocation5], %s1166
        %s1168 = sand.u32 %s197, 1
        %s1169 = smul.addr %s1168, 128
        %s1170 = scalar_lea.vmem [#allocation9], %s1169
        // Predicated region
        $region69: #{tpu_custom_call.1} parent=47 // pred_check
          %p1171 = pneg %p207
        $region70: #{tpu_custom_call.1} parent=47 // pred_check_branch
          %1173 = sbr.rel (%p1171) target = $region72
        $region71: #{tpu_custom_call.1} parent=47 // pred_region
          %s1174 = smul.u32 16, %s29
          %s1176 = ssub.s32 2048, 2048
          %1177 = vsyncadd %s1167, %s1176
          %s1178 = smul.addr %s1174, 128
          %s1179 = scalar_lea.hbm %s7, %s1178
          %s1180 = sshll.u32 %s1170, 4
          %s1181 = int_to_ptr.vmem [resolvable:$true] %s1180
          %1186 = dma.vmem_to_hbm [thread:$0]  %s1181, 2048, %s1179, %s1167, 128, 128, 8
        $region72: #{tpu_custom_call.1} parent=47 // pred_fallthru
          _
      $region48: #{tpu_custom_call.1} parent=5 // pred_fallthru
        _
      %p1187 = scmp.le.s32.totalorder 2, %s20
      // Predicated region
      $region73: #{tpu_custom_call.1} parent=5 // pred_check
        %p1188 = pneg %p1187
      $region74: #{tpu_custom_call.1} parent=5 // pred_check_branch
        %1190 = sbr.rel (%p1188) target = $region76
      $region75: #{tpu_custom_call.1} parent=5 // pred_region
        %s1191 = ssub.s32 %s20, 2
        // Predicated region
        $region77: #{tpu_custom_call.1} parent=75 // pred_check
          %p1192 = pneg %p213
        $region78: #{tpu_custom_call.1} parent=75 // pred_check_branch
          %1194 = sbr.rel (%p1192) target = $region80
        $region79: #{tpu_custom_call.1} parent=75 // pred_region
          %s1195 = sand.u32 %s198, 1
          %s1196 = scalar_lea.sflag [#allocation5], %s1195
          %s1197 = sand.u32 %s198, 1
          %s1198 = smul.addr %s1197, 128
          %s1199 = scalar_lea.vmem [#allocation9], %s1198
          %1200 = dma.done %s1196, 2048
        $region80: #{tpu_custom_call.1} parent=75 // pred_fallthru
          _
      $region76: #{tpu_custom_call.1} parent=5 // pred_fallthru
        _
    $region6: #{tpu_custom_call.1} parent=1 // loop_footer
      %s24 = sadd.s32 1, %s20
    $region7: #{tpu_custom_call.1} parent=1 // loop_footer_branch
      %19 = sbr.rel target = $region3
    $region8: #{tpu_custom_call.1} parent=1 // loop_exit
      _
    %1201 = vsyncpa [#allocation4], 1
    %s1202 = scalar_lea.sflag [#allocation4], 1
    %1203 = vsyncpa %s1202, 1
    %1204 = vsyncpa [#allocation7], 1
    %1205 = vsyncpa [#allocation5], 1
    %s1206 = scalar_lea.sflag [#allocation5], 1
    %1207 = vsyncpa %s1206, 1

</llo_original>
